<compile_context>
chip_gen: v5e
topology: v5e:2x2
jax: 0.10.0
libtpu: 0.0.40
codegen_flags: <defaults>
</compile_context>

<pallas_src>
import jax
import jax.numpy as jnp
from jax.experimental import pallas as pl
from jax.experimental.pallas import tpu as pltpu

INPUT_SIZE = 28      # matches the module's input_size
HIDDEN = 32          # small demo hidden size (original module uses 256)
NUM_CLASSES = 10
NUM_LAYERS = 2       # structure hard-coded in the kernel (layer 0 feeds layer 1)
SEQ_LEN = 8
BATCH = 16           # multiple of 8 (f32 sublane group) — the single largest perf lever
B_BLK = 8            # batch block per grid step; "parallel" axis shards across v7x's 2 TCs


def lstm_fc_kernel(x_ref, wih0_ref, whh0_ref, b0_ref,
                   wih1_ref, whh1_ref, b1_ref, wfc_ref, bfc_ref,
                   out_ref):
    """2-layer LSTM recurrence + final FC for one batch block, in one kernel invocation.

    x_ref:   (T, Bb, I) bf16, time-major (timestep t = x_ref[t])
    wih0:    (I, 4H)    bf16  layer-0 input->gates
    whh0:    (H, 4H)    bf16  layer-0 hidden->gates
    b0:      (1, 4H)    f32   layer-0 combined bias (b_ih + b_hh)
    wih1:    (H, 4H)    bf16  layer-1 input(=h0)->gates
    whh1:    (H, 4H)    bf16  layer-1 hidden->gates
    b1:      (1, 4H)    f32   layer-1 combined bias
    wfc:     (H, C)     bf16  fc weight (transposed vs PyTorch)
    bfc:     (1, C)     f32   fc bias
    out_ref: (Bb, C)    f32
    """
    T, B, I = x_ref.shape
    H = whh0_ref.shape[0]
    bf16 = jnp.bfloat16

    # ---- Off-the-critical-path precompute --------------------------------------
    # Layer-0 input projection for all T timesteps as ONE matmul, bias folded in.
    # The (T, B, I) -> (T*B, I) collapse is a layout no-op (B = 8 sublanes, lanes kept).
    xproj = (jnp.dot(x_ref[...].reshape(T * B, I), wih0_ref[...],
                     preferred_element_type=jnp.float32)
             + b0_ref[...])                                   # (T*B, 4H) f32

    # Hoist the layer-1 bias broadcast out of the recurrence (JAX does not CSE
    # broadcast_in_dim; inlined it would be re-emitted every timestep).
    bias1 = jnp.broadcast_to(b1_ref[...], (B, 4 * H))

    def gate_combine(gates, c):
        # Full-width sigmoid over the (B, 4H) gates slab; tanh only on the g slice
        # (review: only 1/4 of a full-width tanh was used — EUP is on the latency path).
        # PyTorch gate order [i, f, g, o].  All elementwise math in f32 (v5e-safe).
        sg = jax.nn.sigmoid(gates)
        i = sg[:, 0 * H:1 * H]
        f = sg[:, 1 * H:2 * H]
        o = sg[:, 3 * H:4 * H]
        g = jnp.tanh(gates[:, 2 * H:3 * H])
        c_new = f * c + i * g
        h_new = o * jnp.tanh(c_new)
        # h is consumed exclusively by bf16 MXU matmuls -> cast exactly once per step.
        return h_new.astype(bf16), c_new

    # h0 = c0 = 0 for both layers (matches torch.zeros init in forward()).
    h0 = jnp.zeros((B, H), bf16)
    h1 = jnp.zeros((B, H), bf16)
    c0 = jnp.zeros((B, H), jnp.float32)
    c1 = jnp.zeros((B, H), jnp.float32)

    # ---- Recurrence: statically unrolled over T --------------------------------
    for t in range(T):
        # Layer 0: only the recurrent half (h0 @ Whh0) remains on the serial chain;
        # the per-step xproj slice is a whole sublane-aligned tile (free).
        g0 = xproj[t * B:(t + 1) * B, :] + jnp.dot(
            h0, whh0_ref[...], preferred_element_type=jnp.float32)
        h0, c0 = gate_combine(g0, c0)

        # Layer 1: two register-fed matmuls (no VMEM staging buffer).  h1 @ Whh1 only
        # depends on the previous step's h1, so it can issue while layer-0 computes.
        g1 = (jnp.dot(h0, wih1_ref[...], preferred_element_type=jnp.float32)
              + jnp.dot(h1, whh1_ref[...], preferred_element_type=jnp.float32)
              + bias1)
        h1, c1 = gate_combine(g1, c1)

    # fc on the last timestep's top-layer hidden state: out = h1_T @ Wfc + bfc
    out_ref[...] = (jnp.dot(h1, wfc_ref[...], preferred_element_type=jnp.float32)
                    + bfc_ref[...])


def rnn_forward(x_bti, params, b_blk=B_BLK):
    """x_bti: (B, T, I) float32 (PyTorch batch_first layout). Returns (B, num_classes)."""
    B, T, I = x_bti.shape
    H, C = HIDDEN, NUM_CLASSES
    assert B % b_blk == 0, "batch must be a multiple of the batch block"

    # Single 3-D transpose to time-major (kept 3-D; no extra reshape pass).  Activations
    # cast to bf16 for MXU-native matmuls; accumulation stays f32 inside the kernel.
    x_tbi = jnp.transpose(x_bti, (1, 0, 2)).astype(jnp.bfloat16)

    # Weights/biases: full-array blocks with a constant index_map -> loaded once and kept
    # resident in VMEM across the batch-parallel grid.
    def w_spec(shape):
        return pl.BlockSpec(shape, lambda b: (0, 0))

    grid_spec = pltpu.PrefetchScalarGridSpec(
        num_scalar_prefetch=0,
        grid=(B // b_blk,),
        in_specs=[
            pl.BlockSpec((T, b_blk, I), lambda b: (0, b, 0)),   # x: block the batch axis
            w_spec((I, 4 * H)),     # wih0
            w_spec((H, 4 * H)),     # whh0
            w_spec((1, 4 * H)),     # b0
            w_spec((H, 4 * H)),     # wih1
            w_spec((H, 4 * H)),     # whh1
            w_spec((1, 4 * H)),     # b1
            w_spec((H, C)),         # wfc
            w_spec((1, C)),         # bfc
        ],
        out_specs=pl.BlockSpec((b_blk, C), lambda b: (b, 0)),
    )

    out = pl.pallas_call(
        lstm_fc_kernel,
        out_shape=jax.ShapeDtypeStruct((B, C), jnp.float32),
        grid_spec=grid_spec,
        compiler_params=pltpu.CompilerParams(
            dimension_semantics=("parallel",)),   # shards batch blocks across v7x's 2 TCs
    )(x_tbi,
      params["wih0"], params["whh0"], params["b0"],
      params["wih1"], params["whh1"], params["b1"],
      params["wfc"], params["bfc"])
    return out


def init_params(key):
    """Deterministic params, PyTorch-style U(-1/sqrt(H), 1/sqrt(H)) init.

    Weights are stored pre-transposed for the kernel and cast to bf16:
      wih0: (I, 4H), whh0/wih1/whh1: (H, 4H), wfc: (H, C)
    Biases stay f32 and are combined (b_ih + b_hh folded into one bias; an
    init-distribution nuance vs PyTorch's sum of two uniforms, not a math difference):
      b0/b1: (1, 4H), bfc: (1, C)
    """
    H, I, C = HIDDEN, INPUT_SIZE, NUM_CLASSES
    bound = 1.0 / jnp.sqrt(jnp.float32(H))
    ks = jax.random.split(key, 8)
    u = lambda k, shape: jax.random.uniform(k, shape, jnp.float32, -bound, bound)
    bf = jnp.bfloat16
    return {
        "wih0": u(ks[0], (I, 4 * H)).astype(bf),
        "whh0": u(ks[1], (H, 4 * H)).astype(bf),
        "b0":   u(ks[2], (1, 4 * H)),
        "wih1": u(ks[3], (H, 4 * H)).astype(bf),
        "whh1": u(ks[4], (H, 4 * H)).astype(bf),
        "b1":   u(ks[5], (1, 4 * H)),
        "wfc":  u(ks[6], (H, C)).astype(bf),
        "bfc":  u(ks[7], (1, C)),
    }


def rnn_forward_ref(x_bti, params):
    """Pure-JAX reference of the same forward pass (bf16 matmuls, f32 everything else)."""
    B, T, I = x_bti.shape
    H = HIDDEN
    bf = jnp.bfloat16

    def mm(a, w):
        return jnp.dot(a.astype(bf), w, preferred_element_type=jnp.float32)

    def cell(x_t, h, c, wih, whh, b):
        gates = mm(x_t, wih) + mm(h, whh) + b
        i = jax.nn.sigmoid(gates[:, :H])
        f = jax.nn.sigmoid(gates[:, H:2 * H])
        g = jnp.tanh(gates[:, 2 * H:3 * H])
        o = jax.nn.sigmoid(gates[:, 3 * H:])
        c = f * c + i * g
        h = o * jnp.tanh(c)
        return h, c

    h0 = c0 = h1 = c1 = jnp.zeros((B, H), jnp.float32)
    for t in range(T):
        h0, c0 = cell(x_bti[:, t], h0, c0, params["wih0"], params["whh0"], params["b0"])
        h1, c1 = cell(h0, h1, c1, params["wih1"], params["whh1"], params["b1"])
    return mm(h1, params["wfc"]) + params["bfc"]


if __name__ == "__main__":
    key = jax.random.PRNGKey(0)
    k_x, k_p = jax.random.split(key)
    x = jax.random.normal(k_x, (BATCH, SEQ_LEN, INPUT_SIZE), jnp.float32)
    params = init_params(k_p)

    out = jax.block_until_ready(rnn_forward(x, params))
    ref = rnn_forward_ref(x, params)

    assert out.shape == (BATCH, NUM_CLASSES)
    # bf16 matmuls and a single bf16 h-cast per step on both sides; remaining delta is
    # f32 accumulation-order noise plus rare bf16 ulp flips through the 8-step recurrence.
    assert jnp.allclose(out, ref, atol=5e-3, rtol=5e-3), "mismatch vs JAX reference"

    print("KERNEL_OK")
</pallas_src>

<mosaic_0001>
module attributes {stable_mosaic.version = 11 : i64} {
  func.func @lstm_fc_kernel(%arg0: i32, %arg1: memref<8x8x28xbf16, #tpu.memory_space<vmem>>, %arg2: memref<28x128xbf16, #tpu.memory_space<vmem>>, %arg3: memref<32x128xbf16, #tpu.memory_space<vmem>>, %arg4: memref<1x128xf32, #tpu.memory_space<vmem>>, %arg5: memref<32x128xbf16, #tpu.memory_space<vmem>>, %arg6: memref<32x128xbf16, #tpu.memory_space<vmem>>, %arg7: memref<1x128xf32, #tpu.memory_space<vmem>>, %arg8: memref<32x10xbf16, #tpu.memory_space<vmem>>, %arg9: memref<1x10xf32, #tpu.memory_space<vmem>>, %arg10: memref<8x10xf32, #tpu.memory_space<vmem>>) attributes {dimension_semantics = [#tpu.dimension_semantics<parallel>], iteration_bounds = array<i64: 2>, scalar_prefetch = 0 : i64, scratch_operands = 0 : i64, tpu.core_type = #tpu.core_type<tc>, window_params = [{transform_indices = @transform_0, window_bounds = array<i64: 8, 8, 28>}, {pipeline_mode = #tpu.pipeline_mode<synchronous>, transform_indices = @transform_1, window_bounds = array<i64: 28, 128>}, {pipeline_mode = #tpu.pipeline_mode<synchronous>, transform_indices = @transform_2, window_bounds = array<i64: 32, 128>}, {pipeline_mode = #tpu.pipeline_mode<synchronous>, transform_indices = @transform_3, window_bounds = array<i64: 1, 128>}, {pipeline_mode = #tpu.pipeline_mode<synchronous>, transform_indices = @transform_4, window_bounds = array<i64: 32, 128>}, {pipeline_mode = #tpu.pipeline_mode<synchronous>, transform_indices = @transform_5, window_bounds = array<i64: 32, 128>}, {pipeline_mode = #tpu.pipeline_mode<synchronous>, transform_indices = @transform_6, window_bounds = array<i64: 1, 128>}, {pipeline_mode = #tpu.pipeline_mode<synchronous>, transform_indices = @transform_7, window_bounds = array<i64: 32, 10>}, {pipeline_mode = #tpu.pipeline_mode<synchronous>, transform_indices = @transform_8, window_bounds = array<i64: 1, 10>}, {transform_indices = @transform_9, window_bounds = array<i64: 8, 10>}]} {
    %c0 = arith.constant 0 : index
    %c0_0 = arith.constant 0 : index
    %c0_1 = arith.constant 0 : index
    %0 = vector.load %arg1[%c0, %c0_0, %c0_1] : memref<8x8x28xbf16, #tpu.memory_space<vmem>>, vector<8x8x28xbf16>
    %1 = vector.shape_cast %0 : vector<8x8x28xbf16> to vector<64x28xbf16>
    %c0_2 = arith.constant 0 : index
    %c0_3 = arith.constant 0 : index
    %2 = vector.load %arg2[%c0_2, %c0_3] : memref<28x128xbf16, #tpu.memory_space<vmem>>, vector<28x128xbf16>
    %cst = arith.constant dense<0.000000e+00> : vector<64x128xf32>
    %3 = tpu.matmul %1, %2, %cst {dimension_numbers = #tpu.dot_dimension_numbers<[1], [0], [0], [1], [0, 0, 1, 1], [], []>} : vector<64x28xbf16>, vector<28x128xbf16>, vector<64x128xf32> -> vector<64x128xf32>
    %c0_4 = arith.constant 0 : index
    %c0_5 = arith.constant 0 : index
    %4 = vector.load %arg4[%c0_4, %c0_5] : memref<1x128xf32, #tpu.memory_space<vmem>>, vector<1x128xf32>
    %5 = vector.broadcast %4 : vector<1x128xf32> to vector<64x128xf32>
    %6 = arith.addf %3, %5 : vector<64x128xf32>
    %c0_6 = arith.constant 0 : index
    %c0_7 = arith.constant 0 : index
    %7 = vector.load %arg7[%c0_6, %c0_7] : memref<1x128xf32, #tpu.memory_space<vmem>>, vector<1x128xf32>
    %8 = vector.shape_cast %7 : vector<1x128xf32> to vector<1x128xf32>
    %9 = vector.broadcast %8 : vector<1x128xf32> to vector<8x128xf32>
    %cst_8 = arith.constant 0.000000e+00 : bf16
    %10 = vector.broadcast %cst_8 : bf16 to vector<8x32xbf16>
    %cst_9 = arith.constant 0.000000e+00 : bf16
    %11 = vector.broadcast %cst_9 : bf16 to vector<8x32xbf16>
    %cst_10 = arith.constant 0.000000e+00 : f32
    %12 = vector.broadcast %cst_10 : f32 to vector<8x32xf32>
    %cst_11 = arith.constant 0.000000e+00 : f32
    %13 = vector.broadcast %cst_11 : f32 to vector<8x32xf32>
    %14 = vector.extract_strided_slice %6 {offsets = [0, 0], sizes = [8, 128], strides = [1, 1]} : vector<64x128xf32> to vector<8x128xf32>
    %c0_12 = arith.constant 0 : index
    %c0_13 = arith.constant 0 : index
    %15 = vector.load %arg3[%c0_12, %c0_13] : memref<32x128xbf16, #tpu.memory_space<vmem>>, vector<32x128xbf16>
    %cst_14 = arith.constant dense<0.000000e+00> : vector<8x128xf32>
    %16 = tpu.matmul %10, %15, %cst_14 {dimension_numbers = #tpu.dot_dimension_numbers<[1], [0], [0], [1], [0, 0, 1, 1], [], []>} : vector<8x32xbf16>, vector<32x128xbf16>, vector<8x128xf32> -> vector<8x128xf32>
    %17 = arith.addf %14, %16 : vector<8x128xf32>
    %18 = arith.negf %17 : vector<8x128xf32>
    %19 = math.exp %18 : vector<8x128xf32>
    %cst_15 = arith.constant 1.000000e+00 : f32
    %20 = vector.broadcast %cst_15 : f32 to vector<8x128xf32>
    %21 = arith.addf %20, %19 : vector<8x128xf32>
    %22 = arith.divf %20, %21 : vector<8x128xf32>
    %23 = vector.extract_strided_slice %22 {offsets = [0, 0], sizes = [8, 32], strides = [1, 1]} : vector<8x128xf32> to vector<8x32xf32>
    %24 = vector.extract_strided_slice %22 {offsets = [0, 32], sizes = [8, 32], strides = [1, 1]} : vector<8x128xf32> to vector<8x32xf32>
    %25 = vector.extract_strided_slice %22 {offsets = [0, 96], sizes = [8, 32], strides = [1, 1]} : vector<8x128xf32> to vector<8x32xf32>
    %26 = vector.extract_strided_slice %17 {offsets = [0, 64], sizes = [8, 32], strides = [1, 1]} : vector<8x128xf32> to vector<8x32xf32>
    %27 = math.tanh %26 : vector<8x32xf32>
    %28 = arith.mulf %24, %12 : vector<8x32xf32>
    %29 = arith.mulf %23, %27 : vector<8x32xf32>
    %30 = arith.addf %28, %29 : vector<8x32xf32>
    %31 = math.tanh %30 : vector<8x32xf32>
    %32 = arith.mulf %25, %31 : vector<8x32xf32>
    %33 = arith.truncf %32 : vector<8x32xf32> to vector<8x32xbf16>
    %c0_16 = arith.constant 0 : index
    %c0_17 = arith.constant 0 : index
    %34 = vector.load %arg5[%c0_16, %c0_17] : memref<32x128xbf16, #tpu.memory_space<vmem>>, vector<32x128xbf16>
    %cst_18 = arith.constant dense<0.000000e+00> : vector<8x128xf32>
    %35 = tpu.matmul %33, %34, %cst_18 {dimension_numbers = #tpu.dot_dimension_numbers<[1], [0], [0], [1], [0, 0, 1, 1], [], []>} : vector<8x32xbf16>, vector<32x128xbf16>, vector<8x128xf32> -> vector<8x128xf32>
    %c0_19 = arith.constant 0 : index
    %c0_20 = arith.constant 0 : index
    %36 = vector.load %arg6[%c0_19, %c0_20] : memref<32x128xbf16, #tpu.memory_space<vmem>>, vector<32x128xbf16>
    %cst_21 = arith.constant dense<0.000000e+00> : vector<8x128xf32>
    %37 = tpu.matmul %11, %36, %cst_21 {dimension_numbers = #tpu.dot_dimension_numbers<[1], [0], [0], [1], [0, 0, 1, 1], [], []>} : vector<8x32xbf16>, vector<32x128xbf16>, vector<8x128xf32> -> vector<8x128xf32>
    %38 = arith.addf %35, %37 : vector<8x128xf32>
    %39 = arith.addf %38, %9 : vector<8x128xf32>
    %40 = arith.negf %39 : vector<8x128xf32>
    %41 = math.exp %40 : vector<8x128xf32>
    %cst_22 = arith.constant 1.000000e+00 : f32
    %42 = vector.broadcast %cst_22 : f32 to vector<8x128xf32>
    %43 = arith.addf %42, %41 : vector<8x128xf32>
    %44 = arith.divf %42, %43 : vector<8x128xf32>
    %45 = vector.extract_strided_slice %44 {offsets = [0, 0], sizes = [8, 32], strides = [1, 1]} : vector<8x128xf32> to vector<8x32xf32>
    %46 = vector.extract_strided_slice %44 {offsets = [0, 32], sizes = [8, 32], strides = [1, 1]} : vector<8x128xf32> to vector<8x32xf32>
    %47 = vector.extract_strided_slice %44 {offsets = [0, 96], sizes = [8, 32], strides = [1, 1]} : vector<8x128xf32> to vector<8x32xf32>
    %48 = vector.extract_strided_slice %39 {offsets = [0, 64], sizes = [8, 32], strides = [1, 1]} : vector<8x128xf32> to vector<8x32xf32>
    %49 = math.tanh %48 : vector<8x32xf32>
    %50 = arith.mulf %46, %13 : vector<8x32xf32>
    %51 = arith.mulf %45, %49 : vector<8x32xf32>
    %52 = arith.addf %50, %51 : vector<8x32xf32>
    %53 = math.tanh %52 : vector<8x32xf32>
    %54 = arith.mulf %47, %53 : vector<8x32xf32>
    %55 = arith.truncf %54 : vector<8x32xf32> to vector<8x32xbf16>
    %56 = vector.extract_strided_slice %6 {offsets = [8, 0], sizes = [8, 128], strides = [1, 1]} : vector<64x128xf32> to vector<8x128xf32>
    %c0_23 = arith.constant 0 : index
    %c0_24 = arith.constant 0 : index
    %57 = vector.load %arg3[%c0_23, %c0_24] : memref<32x128xbf16, #tpu.memory_space<vmem>>, vector<32x128xbf16>
    %cst_25 = arith.constant dense<0.000000e+00> : vector<8x128xf32>
    %58 = tpu.matmul %33, %57, %cst_25 {dimension_numbers = #tpu.dot_dimension_numbers<[1], [0], [0], [1], [0, 0, 1, 1], [], []>} : vector<8x32xbf16>, vector<32x128xbf16>, vector<8x128xf32> -> vector<8x128xf32>
    %59 = arith.addf %56, %58 : vector<8x128xf32>
    %60 = arith.negf %59 : vector<8x128xf32>
    %61 = math.exp %60 : vector<8x128xf32>
    %cst_26 = arith.constant 1.000000e+00 : f32
    %62 = vector.broadcast %cst_26 : f32 to vector<8x128xf32>
    %63 = arith.addf %62, %61 : vector<8x128xf32>
    %64 = arith.divf %62, %63 : vector<8x128xf32>
    %65 = vector.extract_strided_slice %64 {offsets = [0, 0], sizes = [8, 32], strides = [1, 1]} : vector<8x128xf32> to vector<8x32xf32>
    %66 = vector.extract_strided_slice %64 {offsets = [0, 32], sizes = [8, 32], strides = [1, 1]} : vector<8x128xf32> to vector<8x32xf32>
    %67 = vector.extract_strided_slice %64 {offsets = [0, 96], sizes = [8, 32], strides = [1, 1]} : vector<8x128xf32> to vector<8x32xf32>
    %68 = vector.extract_strided_slice %59 {offsets = [0, 64], sizes = [8, 32], strides = [1, 1]} : vector<8x128xf32> to vector<8x32xf32>
    %69 = math.tanh %68 : vector<8x32xf32>
    %70 = arith.mulf %66, %30 : vector<8x32xf32>
    %71 = arith.mulf %65, %69 : vector<8x32xf32>
    %72 = arith.addf %70, %71 : vector<8x32xf32>
    %73 = math.tanh %72 : vector<8x32xf32>
    %74 = arith.mulf %67, %73 : vector<8x32xf32>
    %75 = arith.truncf %74 : vector<8x32xf32> to vector<8x32xbf16>
    %c0_27 = arith.constant 0 : index
    %c0_28 = arith.constant 0 : index
    %76 = vector.load %arg5[%c0_27, %c0_28] : memref<32x128xbf16, #tpu.memory_space<vmem>>, vector<32x128xbf16>
    %cst_29 = arith.constant dense<0.000000e+00> : vector<8x128xf32>
    %77 = tpu.matmul %75, %76, %cst_29 {dimension_numbers = #tpu.dot_dimension_numbers<[1], [0], [0], [1], [0, 0, 1, 1], [], []>} : vector<8x32xbf16>, vector<32x128xbf16>, vector<8x128xf32> -> vector<8x128xf32>
    %c0_30 = arith.constant 0 : index
    %c0_31 = arith.constant 0 : index
    %78 = vector.load %arg6[%c0_30, %c0_31] : memref<32x128xbf16, #tpu.memory_space<vmem>>, vector<32x128xbf16>
    %cst_32 = arith.constant dense<0.000000e+00> : vector<8x128xf32>
    %79 = tpu.matmul %55, %78, %cst_32 {dimension_numbers = #tpu.dot_dimension_numbers<[1], [0], [0], [1], [0, 0, 1, 1], [], []>} : vector<8x32xbf16>, vector<32x128xbf16>, vector<8x128xf32> -> vector<8x128xf32>
    %80 = arith.addf %77, %79 : vector<8x128xf32>
    %81 = arith.addf %80, %9 : vector<8x128xf32>
    %82 = arith.negf %81 : vector<8x128xf32>
    %83 = math.exp %82 : vector<8x128xf32>
    %cst_33 = arith.constant 1.000000e+00 : f32
    %84 = vector.broadcast %cst_33 : f32 to vector<8x128xf32>
    %85 = arith.addf %84, %83 : vector<8x128xf32>
    %86 = arith.divf %84, %85 : vector<8x128xf32>
    %87 = vector.extract_strided_slice %86 {offsets = [0, 0], sizes = [8, 32], strides = [1, 1]} : vector<8x128xf32> to vector<8x32xf32>
    %88 = vector.extract_strided_slice %86 {offsets = [0, 32], sizes = [8, 32], strides = [1, 1]} : vector<8x128xf32> to vector<8x32xf32>
    %89 = vector.extract_strided_slice %86 {offsets = [0, 96], sizes = [8, 32], strides = [1, 1]} : vector<8x128xf32> to vector<8x32xf32>
    %90 = vector.extract_strided_slice %81 {offsets = [0, 64], sizes = [8, 32], strides = [1, 1]} : vector<8x128xf32> to vector<8x32xf32>
    %91 = math.tanh %90 : vector<8x32xf32>
    %92 = arith.mulf %88, %52 : vector<8x32xf32>
    %93 = arith.mulf %87, %91 : vector<8x32xf32>
    %94 = arith.addf %92, %93 : vector<8x32xf32>
    %95 = math.tanh %94 : vector<8x32xf32>
    %96 = arith.mulf %89, %95 : vector<8x32xf32>
    %97 = arith.truncf %96 : vector<8x32xf32> to vector<8x32xbf16>
    %98 = vector.extract_strided_slice %6 {offsets = [16, 0], sizes = [8, 128], strides = [1, 1]} : vector<64x128xf32> to vector<8x128xf32>
    %c0_34 = arith.constant 0 : index
    %c0_35 = arith.constant 0 : index
    %99 = vector.load %arg3[%c0_34, %c0_35] : memref<32x128xbf16, #tpu.memory_space<vmem>>, vector<32x128xbf16>
    %cst_36 = arith.constant dense<0.000000e+00> : vector<8x128xf32>
    %100 = tpu.matmul %75, %99, %cst_36 {dimension_numbers = #tpu.dot_dimension_numbers<[1], [0], [0], [1], [0, 0, 1, 1], [], []>} : vector<8x32xbf16>, vector<32x128xbf16>, vector<8x128xf32> -> vector<8x128xf32>
    %101 = arith.addf %98, %100 : vector<8x128xf32>
    %102 = arith.negf %101 : vector<8x128xf32>
    %103 = math.exp %102 : vector<8x128xf32>
    %cst_37 = arith.constant 1.000000e+00 : f32
    %104 = vector.broadcast %cst_37 : f32 to vector<8x128xf32>
    %105 = arith.addf %104, %103 : vector<8x128xf32>
    %106 = arith.divf %104, %105 : vector<8x128xf32>
    %107 = vector.extract_strided_slice %106 {offsets = [0, 0], sizes = [8, 32], strides = [1, 1]} : vector<8x128xf32> to vector<8x32xf32>
    %108 = vector.extract_strided_slice %106 {offsets = [0, 32], sizes = [8, 32], strides = [1, 1]} : vector<8x128xf32> to vector<8x32xf32>
    %109 = vector.extract_strided_slice %106 {offsets = [0, 96], sizes = [8, 32], strides = [1, 1]} : vector<8x128xf32> to vector<8x32xf32>
    %110 = vector.extract_strided_slice %101 {offsets = [0, 64], sizes = [8, 32], strides = [1, 1]} : vector<8x128xf32> to vector<8x32xf32>
    %111 = math.tanh %110 : vector<8x32xf32>
    %112 = arith.mulf %108, %72 : vector<8x32xf32>
    %113 = arith.mulf %107, %111 : vector<8x32xf32>
    %114 = arith.addf %112, %113 : vector<8x32xf32>
    %115 = math.tanh %114 : vector<8x32xf32>
    %116 = arith.mulf %109, %115 : vector<8x32xf32>
    %117 = arith.truncf %116 : vector<8x32xf32> to vector<8x32xbf16>
    %c0_38 = arith.constant 0 : index
    %c0_39 = arith.constant 0 : index
    %118 = vector.load %arg5[%c0_38, %c0_39] : memref<32x128xbf16, #tpu.memory_space<vmem>>, vector<32x128xbf16>
    %cst_40 = arith.constant dense<0.000000e+00> : vector<8x128xf32>
    %119 = tpu.matmul %117, %118, %cst_40 {dimension_numbers = #tpu.dot_dimension_numbers<[1], [0], [0], [1], [0, 0, 1, 1], [], []>} : vector<8x32xbf16>, vector<32x128xbf16>, vector<8x128xf32> -> vector<8x128xf32>
    %c0_41 = arith.constant 0 : index
    %c0_42 = arith.constant 0 : index
    %120 = vector.load %arg6[%c0_41, %c0_42] : memref<32x128xbf16, #tpu.memory_space<vmem>>, vector<32x128xbf16>
    %cst_43 = arith.constant dense<0.000000e+00> : vector<8x128xf32>
    %121 = tpu.matmul %97, %120, %cst_43 {dimension_numbers = #tpu.dot_dimension_numbers<[1], [0], [0], [1], [0, 0, 1, 1], [], []>} : vector<8x32xbf16>, vector<32x128xbf16>, vector<8x128xf32> -> vector<8x128xf32>
    %122 = arith.addf %119, %121 : vector<8x128xf32>
    %123 = arith.addf %122, %9 : vector<8x128xf32>
    %124 = arith.negf %123 : vector<8x128xf32>
    %125 = math.exp %124 : vector<8x128xf32>
    %cst_44 = arith.constant 1.000000e+00 : f32
    %126 = vector.broadcast %cst_44 : f32 to vector<8x128xf32>
    %127 = arith.addf %126, %125 : vector<8x128xf32>
    %128 = arith.divf %126, %127 : vector<8x128xf32>
    %129 = vector.extract_strided_slice %128 {offsets = [0, 0], sizes = [8, 32], strides = [1, 1]} : vector<8x128xf32> to vector<8x32xf32>
    %130 = vector.extract_strided_slice %128 {offsets = [0, 32], sizes = [8, 32], strides = [1, 1]} : vector<8x128xf32> to vector<8x32xf32>
    %131 = vector.extract_strided_slice %128 {offsets = [0, 96], sizes = [8, 32], strides = [1, 1]} : vector<8x128xf32> to vector<8x32xf32>
    %132 = vector.extract_strided_slice %123 {offsets = [0, 64], sizes = [8, 32], strides = [1, 1]} : vector<8x128xf32> to vector<8x32xf32>
    %133 = math.tanh %132 : vector<8x32xf32>
    %134 = arith.mulf %130, %94 : vector<8x32xf32>
    %135 = arith.mulf %129, %133 : vector<8x32xf32>
    %136 = arith.addf %134, %135 : vector<8x32xf32>
    %137 = math.tanh %136 : vector<8x32xf32>
    %138 = arith.mulf %131, %137 : vector<8x32xf32>
    %139 = arith.truncf %138 : vector<8x32xf32> to vector<8x32xbf16>
    %140 = vector.extract_strided_slice %6 {offsets = [24, 0], sizes = [8, 128], strides = [1, 1]} : vector<64x128xf32> to vector<8x128xf32>
    %c0_45 = arith.constant 0 : index
    %c0_46 = arith.constant 0 : index
    %141 = vector.load %arg3[%c0_45, %c0_46] : memref<32x128xbf16, #tpu.memory_space<vmem>>, vector<32x128xbf16>
    %cst_47 = arith.constant dense<0.000000e+00> : vector<8x128xf32>
    %142 = tpu.matmul %117, %141, %cst_47 {dimension_numbers = #tpu.dot_dimension_numbers<[1], [0], [0], [1], [0, 0, 1, 1], [], []>} : vector<8x32xbf16>, vector<32x128xbf16>, vector<8x128xf32> -> vector<8x128xf32>
    %143 = arith.addf %140, %142 : vector<8x128xf32>
    %144 = arith.negf %143 : vector<8x128xf32>
    %145 = math.exp %144 : vector<8x128xf32>
    %cst_48 = arith.constant 1.000000e+00 : f32
    %146 = vector.broadcast %cst_48 : f32 to vector<8x128xf32>
    %147 = arith.addf %146, %145 : vector<8x128xf32>
    %148 = arith.divf %146, %147 : vector<8x128xf32>
    %149 = vector.extract_strided_slice %148 {offsets = [0, 0], sizes = [8, 32], strides = [1, 1]} : vector<8x128xf32> to vector<8x32xf32>
    %150 = vector.extract_strided_slice %148 {offsets = [0, 32], sizes = [8, 32], strides = [1, 1]} : vector<8x128xf32> to vector<8x32xf32>
    %151 = vector.extract_strided_slice %148 {offsets = [0, 96], sizes = [8, 32], strides = [1, 1]} : vector<8x128xf32> to vector<8x32xf32>
    %152 = vector.extract_strided_slice %143 {offsets = [0, 64], sizes = [8, 32], strides = [1, 1]} : vector<8x128xf32> to vector<8x32xf32>
    %153 = math.tanh %152 : vector<8x32xf32>
    %154 = arith.mulf %150, %114 : vector<8x32xf32>
    %155 = arith.mulf %149, %153 : vector<8x32xf32>
    %156 = arith.addf %154, %155 : vector<8x32xf32>
    %157 = math.tanh %156 : vector<8x32xf32>
    %158 = arith.mulf %151, %157 : vector<8x32xf32>
    %159 = arith.truncf %158 : vector<8x32xf32> to vector<8x32xbf16>
    %c0_49 = arith.constant 0 : index
    %c0_50 = arith.constant 0 : index
    %160 = vector.load %arg5[%c0_49, %c0_50] : memref<32x128xbf16, #tpu.memory_space<vmem>>, vector<32x128xbf16>
    %cst_51 = arith.constant dense<0.000000e+00> : vector<8x128xf32>
    %161 = tpu.matmul %159, %160, %cst_51 {dimension_numbers = #tpu.dot_dimension_numbers<[1], [0], [0], [1], [0, 0, 1, 1], [], []>} : vector<8x32xbf16>, vector<32x128xbf16>, vector<8x128xf32> -> vector<8x128xf32>
    %c0_52 = arith.constant 0 : index
    %c0_53 = arith.constant 0 : index
    %162 = vector.load %arg6[%c0_52, %c0_53] : memref<32x128xbf16, #tpu.memory_space<vmem>>, vector<32x128xbf16>
    %cst_54 = arith.constant dense<0.000000e+00> : vector<8x128xf32>
    %163 = tpu.matmul %139, %162, %cst_54 {dimension_numbers = #tpu.dot_dimension_numbers<[1], [0], [0], [1], [0, 0, 1, 1], [], []>} : vector<8x32xbf16>, vector<32x128xbf16>, vector<8x128xf32> -> vector<8x128xf32>
    %164 = arith.addf %161, %163 : vector<8x128xf32>
    %165 = arith.addf %164, %9 : vector<8x128xf32>
    %166 = arith.negf %165 : vector<8x128xf32>
    %167 = math.exp %166 : vector<8x128xf32>
    %cst_55 = arith.constant 1.000000e+00 : f32
    %168 = vector.broadcast %cst_55 : f32 to vector<8x128xf32>
    %169 = arith.addf %168, %167 : vector<8x128xf32>
    %170 = arith.divf %168, %169 : vector<8x128xf32>
    %171 = vector.extract_strided_slice %170 {offsets = [0, 0], sizes = [8, 32], strides = [1, 1]} : vector<8x128xf32> to vector<8x32xf32>
    %172 = vector.extract_strided_slice %170 {offsets = [0, 32], sizes = [8, 32], strides = [1, 1]} : vector<8x128xf32> to vector<8x32xf32>
    %173 = vector.extract_strided_slice %170 {offsets = [0, 96], sizes = [8, 32], strides = [1, 1]} : vector<8x128xf32> to vector<8x32xf32>
    %174 = vector.extract_strided_slice %165 {offsets = [0, 64], sizes = [8, 32], strides = [1, 1]} : vector<8x128xf32> to vector<8x32xf32>
    %175 = math.tanh %174 : vector<8x32xf32>
    %176 = arith.mulf %172, %136 : vector<8x32xf32>
    %177 = arith.mulf %171, %175 : vector<8x32xf32>
    %178 = arith.addf %176, %177 : vector<8x32xf32>
    %179 = math.tanh %178 : vector<8x32xf32>
    %180 = arith.mulf %173, %179 : vector<8x32xf32>
    %181 = arith.truncf %180 : vector<8x32xf32> to vector<8x32xbf16>
    %182 = vector.extract_strided_slice %6 {offsets = [32, 0], sizes = [8, 128], strides = [1, 1]} : vector<64x128xf32> to vector<8x128xf32>
    %c0_56 = arith.constant 0 : index
    %c0_57 = arith.constant 0 : index
    %183 = vector.load %arg3[%c0_56, %c0_57] : memref<32x128xbf16, #tpu.memory_space<vmem>>, vector<32x128xbf16>
    %cst_58 = arith.constant dense<0.000000e+00> : vector<8x128xf32>
    %184 = tpu.matmul %159, %183, %cst_58 {dimension_numbers = #tpu.dot_dimension_numbers<[1], [0], [0], [1], [0, 0, 1, 1], [], []>} : vector<8x32xbf16>, vector<32x128xbf16>, vector<8x128xf32> -> vector<8x128xf32>
    %185 = arith.addf %182, %184 : vector<8x128xf32>
    %186 = arith.negf %185 : vector<8x128xf32>
    %187 = math.exp %186 : vector<8x128xf32>
    %cst_59 = arith.constant 1.000000e+00 : f32
    %188 = vector.broadcast %cst_59 : f32 to vector<8x128xf32>
    %189 = arith.addf %188, %187 : vector<8x128xf32>
    %190 = arith.divf %188, %189 : vector<8x128xf32>
    %191 = vector.extract_strided_slice %190 {offsets = [0, 0], sizes = [8, 32], strides = [1, 1]} : vector<8x128xf32> to vector<8x32xf32>
    %192 = vector.extract_strided_slice %190 {offsets = [0, 32], sizes = [8, 32], strides = [1, 1]} : vector<8x128xf32> to vector<8x32xf32>
    %193 = vector.extract_strided_slice %190 {offsets = [0, 96], sizes = [8, 32], strides = [1, 1]} : vector<8x128xf32> to vector<8x32xf32>
    %194 = vector.extract_strided_slice %185 {offsets = [0, 64], sizes = [8, 32], strides = [1, 1]} : vector<8x128xf32> to vector<8x32xf32>
    %195 = math.tanh %194 : vector<8x32xf32>
    %196 = arith.mulf %192, %156 : vector<8x32xf32>
    %197 = arith.mulf %191, %195 : vector<8x32xf32>
    %198 = arith.addf %196, %197 : vector<8x32xf32>
    %199 = math.tanh %198 : vector<8x32xf32>
    %200 = arith.mulf %193, %199 : vector<8x32xf32>
    %201 = arith.truncf %200 : vector<8x32xf32> to vector<8x32xbf16>
    %c0_60 = arith.constant 0 : index
    %c0_61 = arith.constant 0 : index
    %202 = vector.load %arg5[%c0_60, %c0_61] : memref<32x128xbf16, #tpu.memory_space<vmem>>, vector<32x128xbf16>
    %cst_62 = arith.constant dense<0.000000e+00> : vector<8x128xf32>
    %203 = tpu.matmul %201, %202, %cst_62 {dimension_numbers = #tpu.dot_dimension_numbers<[1], [0], [0], [1], [0, 0, 1, 1], [], []>} : vector<8x32xbf16>, vector<32x128xbf16>, vector<8x128xf32> -> vector<8x128xf32>
    %c0_63 = arith.constant 0 : index
    %c0_64 = arith.constant 0 : index
    %204 = vector.load %arg6[%c0_63, %c0_64] : memref<32x128xbf16, #tpu.memory_space<vmem>>, vector<32x128xbf16>
    %cst_65 = arith.constant dense<0.000000e+00> : vector<8x128xf32>
    %205 = tpu.matmul %181, %204, %cst_65 {dimension_numbers = #tpu.dot_dimension_numbers<[1], [0], [0], [1], [0, 0, 1, 1], [], []>} : vector<8x32xbf16>, vector<32x128xbf16>, vector<8x128xf32> -> vector<8x128xf32>
    %206 = arith.addf %203, %205 : vector<8x128xf32>
    %207 = arith.addf %206, %9 : vector<8x128xf32>
    %208 = arith.negf %207 : vector<8x128xf32>
    %209 = math.exp %208 : vector<8x128xf32>
    %cst_66 = arith.constant 1.000000e+00 : f32
    %210 = vector.broadcast %cst_66 : f32 to vector<8x128xf32>
    %211 = arith.addf %210, %209 : vector<8x128xf32>
    %212 = arith.divf %210, %211 : vector<8x128xf32>
    %213 = vector.extract_strided_slice %212 {offsets = [0, 0], sizes = [8, 32], strides = [1, 1]} : vector<8x128xf32> to vector<8x32xf32>
    %214 = vector.extract_strided_slice %212 {offsets = [0, 32], sizes = [8, 32], strides = [1, 1]} : vector<8x128xf32> to vector<8x32xf32>
    %215 = vector.extract_strided_slice %212 {offsets = [0, 96], sizes = [8, 32], strides = [1, 1]} : vector<8x128xf32> to vector<8x32xf32>
    %216 = vector.extract_strided_slice %207 {offsets = [0, 64], sizes = [8, 32], strides = [1, 1]} : vector<8x128xf32> to vector<8x32xf32>
    %217 = math.tanh %216 : vector<8x32xf32>
    %218 = arith.mulf %214, %178 : vector<8x32xf32>
    %219 = arith.mulf %213, %217 : vector<8x32xf32>
    %220 = arith.addf %218, %219 : vector<8x32xf32>
    %221 = math.tanh %220 : vector<8x32xf32>
    %222 = arith.mulf %215, %221 : vector<8x32xf32>
    %223 = arith.truncf %222 : vector<8x32xf32> to vector<8x32xbf16>
    %224 = vector.extract_strided_slice %6 {offsets = [40, 0], sizes = [8, 128], strides = [1, 1]} : vector<64x128xf32> to vector<8x128xf32>
    %c0_67 = arith.constant 0 : index
    %c0_68 = arith.constant 0 : index
    %225 = vector.load %arg3[%c0_67, %c0_68] : memref<32x128xbf16, #tpu.memory_space<vmem>>, vector<32x128xbf16>
    %cst_69 = arith.constant dense<0.000000e+00> : vector<8x128xf32>
    %226 = tpu.matmul %201, %225, %cst_69 {dimension_numbers = #tpu.dot_dimension_numbers<[1], [0], [0], [1], [0, 0, 1, 1], [], []>} : vector<8x32xbf16>, vector<32x128xbf16>, vector<8x128xf32> -> vector<8x128xf32>
    %227 = arith.addf %224, %226 : vector<8x128xf32>
    %228 = arith.negf %227 : vector<8x128xf32>
    %229 = math.exp %228 : vector<8x128xf32>
    %cst_70 = arith.constant 1.000000e+00 : f32
    %230 = vector.broadcast %cst_70 : f32 to vector<8x128xf32>
    %231 = arith.addf %230, %229 : vector<8x128xf32>
    %232 = arith.divf %230, %231 : vector<8x128xf32>
    %233 = vector.extract_strided_slice %232 {offsets = [0, 0], sizes = [8, 32], strides = [1, 1]} : vector<8x128xf32> to vector<8x32xf32>
    %234 = vector.extract_strided_slice %232 {offsets = [0, 32], sizes = [8, 32], strides = [1, 1]} : vector<8x128xf32> to vector<8x32xf32>
    %235 = vector.extract_strided_slice %232 {offsets = [0, 96], sizes = [8, 32], strides = [1, 1]} : vector<8x128xf32> to vector<8x32xf32>
    %236 = vector.extract_strided_slice %227 {offsets = [0, 64], sizes = [8, 32], strides = [1, 1]} : vector<8x128xf32> to vector<8x32xf32>
    %237 = math.tanh %236 : vector<8x32xf32>
    %238 = arith.mulf %234, %198 : vector<8x32xf32>
    %239 = arith.mulf %233, %237 : vector<8x32xf32>
    %240 = arith.addf %238, %239 : vector<8x32xf32>
    %241 = math.tanh %240 : vector<8x32xf32>
    %242 = arith.mulf %235, %241 : vector<8x32xf32>
    %243 = arith.truncf %242 : vector<8x32xf32> to vector<8x32xbf16>
    %c0_71 = arith.constant 0 : index
    %c0_72 = arith.constant 0 : index
    %244 = vector.load %arg5[%c0_71, %c0_72] : memref<32x128xbf16, #tpu.memory_space<vmem>>, vector<32x128xbf16>
    %cst_73 = arith.constant dense<0.000000e+00> : vector<8x128xf32>
    %245 = tpu.matmul %243, %244, %cst_73 {dimension_numbers = #tpu.dot_dimension_numbers<[1], [0], [0], [1], [0, 0, 1, 1], [], []>} : vector<8x32xbf16>, vector<32x128xbf16>, vector<8x128xf32> -> vector<8x128xf32>
    %c0_74 = arith.constant 0 : index
    %c0_75 = arith.constant 0 : index
    %246 = vector.load %arg6[%c0_74, %c0_75] : memref<32x128xbf16, #tpu.memory_space<vmem>>, vector<32x128xbf16>
    %cst_76 = arith.constant dense<0.000000e+00> : vector<8x128xf32>
    %247 = tpu.matmul %223, %246, %cst_76 {dimension_numbers = #tpu.dot_dimension_numbers<[1], [0], [0], [1], [0, 0, 1, 1], [], []>} : vector<8x32xbf16>, vector<32x128xbf16>, vector<8x128xf32> -> vector<8x128xf32>
    %248 = arith.addf %245, %247 : vector<8x128xf32>
    %249 = arith.addf %248, %9 : vector<8x128xf32>
    %250 = arith.negf %249 : vector<8x128xf32>
    %251 = math.exp %250 : vector<8x128xf32>
    %cst_77 = arith.constant 1.000000e+00 : f32
    %252 = vector.broadcast %cst_77 : f32 to vector<8x128xf32>
    %253 = arith.addf %252, %251 : vector<8x128xf32>
    %254 = arith.divf %252, %253 : vector<8x128xf32>
    %255 = vector.extract_strided_slice %254 {offsets = [0, 0], sizes = [8, 32], strides = [1, 1]} : vector<8x128xf32> to vector<8x32xf32>
    %256 = vector.extract_strided_slice %254 {offsets = [0, 32], sizes = [8, 32], strides = [1, 1]} : vector<8x128xf32> to vector<8x32xf32>
    %257 = vector.extract_strided_slice %254 {offsets = [0, 96], sizes = [8, 32], strides = [1, 1]} : vector<8x128xf32> to vector<8x32xf32>
    %258 = vector.extract_strided_slice %249 {offsets = [0, 64], sizes = [8, 32], strides = [1, 1]} : vector<8x128xf32> to vector<8x32xf32>
    %259 = math.tanh %258 : vector<8x32xf32>
    %260 = arith.mulf %256, %220 : vector<8x32xf32>
    %261 = arith.mulf %255, %259 : vector<8x32xf32>
    %262 = arith.addf %260, %261 : vector<8x32xf32>
    %263 = math.tanh %262 : vector<8x32xf32>
    %264 = arith.mulf %257, %263 : vector<8x32xf32>
    %265 = arith.truncf %264 : vector<8x32xf32> to vector<8x32xbf16>
    %266 = vector.extract_strided_slice %6 {offsets = [48, 0], sizes = [8, 128], strides = [1, 1]} : vector<64x128xf32> to vector<8x128xf32>
    %c0_78 = arith.constant 0 : index
    %c0_79 = arith.constant 0 : index
    %267 = vector.load %arg3[%c0_78, %c0_79] : memref<32x128xbf16, #tpu.memory_space<vmem>>, vector<32x128xbf16>
    %cst_80 = arith.constant dense<0.000000e+00> : vector<8x128xf32>
    %268 = tpu.matmul %243, %267, %cst_80 {dimension_numbers = #tpu.dot_dimension_numbers<[1], [0], [0], [1], [0, 0, 1, 1], [], []>} : vector<8x32xbf16>, vector<32x128xbf16>, vector<8x128xf32> -> vector<8x128xf32>
    %269 = arith.addf %266, %268 : vector<8x128xf32>
    %270 = arith.negf %269 : vector<8x128xf32>
    %271 = math.exp %270 : vector<8x128xf32>
    %cst_81 = arith.constant 1.000000e+00 : f32
    %272 = vector.broadcast %cst_81 : f32 to vector<8x128xf32>
    %273 = arith.addf %272, %271 : vector<8x128xf32>
    %274 = arith.divf %272, %273 : vector<8x128xf32>
    %275 = vector.extract_strided_slice %274 {offsets = [0, 0], sizes = [8, 32], strides = [1, 1]} : vector<8x128xf32> to vector<8x32xf32>
    %276 = vector.extract_strided_slice %274 {offsets = [0, 32], sizes = [8, 32], strides = [1, 1]} : vector<8x128xf32> to vector<8x32xf32>
    %277 = vector.extract_strided_slice %274 {offsets = [0, 96], sizes = [8, 32], strides = [1, 1]} : vector<8x128xf32> to vector<8x32xf32>
    %278 = vector.extract_strided_slice %269 {offsets = [0, 64], sizes = [8, 32], strides = [1, 1]} : vector<8x128xf32> to vector<8x32xf32>
    %279 = math.tanh %278 : vector<8x32xf32>
    %280 = arith.mulf %276, %240 : vector<8x32xf32>
    %281 = arith.mulf %275, %279 : vector<8x32xf32>
    %282 = arith.addf %280, %281 : vector<8x32xf32>
    %283 = math.tanh %282 : vector<8x32xf32>
    %284 = arith.mulf %277, %283 : vector<8x32xf32>
    %285 = arith.truncf %284 : vector<8x32xf32> to vector<8x32xbf16>
    %c0_82 = arith.constant 0 : index
    %c0_83 = arith.constant 0 : index
    %286 = vector.load %arg5[%c0_82, %c0_83] : memref<32x128xbf16, #tpu.memory_space<vmem>>, vector<32x128xbf16>
    %cst_84 = arith.constant dense<0.000000e+00> : vector<8x128xf32>
    %287 = tpu.matmul %285, %286, %cst_84 {dimension_numbers = #tpu.dot_dimension_numbers<[1], [0], [0], [1], [0, 0, 1, 1], [], []>} : vector<8x32xbf16>, vector<32x128xbf16>, vector<8x128xf32> -> vector<8x128xf32>
    %c0_85 = arith.constant 0 : index
    %c0_86 = arith.constant 0 : index
    %288 = vector.load %arg6[%c0_85, %c0_86] : memref<32x128xbf16, #tpu.memory_space<vmem>>, vector<32x128xbf16>
    %cst_87 = arith.constant dense<0.000000e+00> : vector<8x128xf32>
    %289 = tpu.matmul %265, %288, %cst_87 {dimension_numbers = #tpu.dot_dimension_numbers<[1], [0], [0], [1], [0, 0, 1, 1], [], []>} : vector<8x32xbf16>, vector<32x128xbf16>, vector<8x128xf32> -> vector<8x128xf32>
    %290 = arith.addf %287, %289 : vector<8x128xf32>
    %291 = arith.addf %290, %9 : vector<8x128xf32>
    %292 = arith.negf %291 : vector<8x128xf32>
    %293 = math.exp %292 : vector<8x128xf32>
    %cst_88 = arith.constant 1.000000e+00 : f32
    %294 = vector.broadcast %cst_88 : f32 to vector<8x128xf32>
    %295 = arith.addf %294, %293 : vector<8x128xf32>
    %296 = arith.divf %294, %295 : vector<8x128xf32>
    %297 = vector.extract_strided_slice %296 {offsets = [0, 0], sizes = [8, 32], strides = [1, 1]} : vector<8x128xf32> to vector<8x32xf32>
    %298 = vector.extract_strided_slice %296 {offsets = [0, 32], sizes = [8, 32], strides = [1, 1]} : vector<8x128xf32> to vector<8x32xf32>
    %299 = vector.extract_strided_slice %296 {offsets = [0, 96], sizes = [8, 32], strides = [1, 1]} : vector<8x128xf32> to vector<8x32xf32>
    %300 = vector.extract_strided_slice %291 {offsets = [0, 64], sizes = [8, 32], strides = [1, 1]} : vector<8x128xf32> to vector<8x32xf32>
    %301 = math.tanh %300 : vector<8x32xf32>
    %302 = arith.mulf %298, %262 : vector<8x32xf32>
    %303 = arith.mulf %297, %301 : vector<8x32xf32>
    %304 = arith.addf %302, %303 : vector<8x32xf32>
    %305 = math.tanh %304 : vector<8x32xf32>
    %306 = arith.mulf %299, %305 : vector<8x32xf32>
    %307 = arith.truncf %306 : vector<8x32xf32> to vector<8x32xbf16>
    %308 = vector.extract_strided_slice %6 {offsets = [56, 0], sizes = [8, 128], strides = [1, 1]} : vector<64x128xf32> to vector<8x128xf32>
    %c0_89 = arith.constant 0 : index
    %c0_90 = arith.constant 0 : index
    %309 = vector.load %arg3[%c0_89, %c0_90] : memref<32x128xbf16, #tpu.memory_space<vmem>>, vector<32x128xbf16>
    %cst_91 = arith.constant dense<0.000000e+00> : vector<8x128xf32>
    %310 = tpu.matmul %285, %309, %cst_91 {dimension_numbers = #tpu.dot_dimension_numbers<[1], [0], [0], [1], [0, 0, 1, 1], [], []>} : vector<8x32xbf16>, vector<32x128xbf16>, vector<8x128xf32> -> vector<8x128xf32>
    %311 = arith.addf %308, %310 : vector<8x128xf32>
    %312 = arith.negf %311 : vector<8x128xf32>
    %313 = math.exp %312 : vector<8x128xf32>
    %cst_92 = arith.constant 1.000000e+00 : f32
    %314 = vector.broadcast %cst_92 : f32 to vector<8x128xf32>
    %315 = arith.addf %314, %313 : vector<8x128xf32>
    %316 = arith.divf %314, %315 : vector<8x128xf32>
    %317 = vector.extract_strided_slice %316 {offsets = [0, 0], sizes = [8, 32], strides = [1, 1]} : vector<8x128xf32> to vector<8x32xf32>
    %318 = vector.extract_strided_slice %316 {offsets = [0, 32], sizes = [8, 32], strides = [1, 1]} : vector<8x128xf32> to vector<8x32xf32>
    %319 = vector.extract_strided_slice %316 {offsets = [0, 96], sizes = [8, 32], strides = [1, 1]} : vector<8x128xf32> to vector<8x32xf32>
    %320 = vector.extract_strided_slice %311 {offsets = [0, 64], sizes = [8, 32], strides = [1, 1]} : vector<8x128xf32> to vector<8x32xf32>
    %321 = math.tanh %320 : vector<8x32xf32>
    %322 = arith.mulf %318, %282 : vector<8x32xf32>
    %323 = arith.mulf %317, %321 : vector<8x32xf32>
    %324 = arith.addf %322, %323 : vector<8x32xf32>
    %325 = math.tanh %324 : vector<8x32xf32>
    %326 = arith.mulf %319, %325 : vector<8x32xf32>
    %327 = arith.truncf %326 : vector<8x32xf32> to vector<8x32xbf16>
    %c0_93 = arith.constant 0 : index
    %c0_94 = arith.constant 0 : index
    %328 = vector.load %arg5[%c0_93, %c0_94] : memref<32x128xbf16, #tpu.memory_space<vmem>>, vector<32x128xbf16>
    %cst_95 = arith.constant dense<0.000000e+00> : vector<8x128xf32>
    %329 = tpu.matmul %327, %328, %cst_95 {dimension_numbers = #tpu.dot_dimension_numbers<[1], [0], [0], [1], [0, 0, 1, 1], [], []>} : vector<8x32xbf16>, vector<32x128xbf16>, vector<8x128xf32> -> vector<8x128xf32>
    %c0_96 = arith.constant 0 : index
    %c0_97 = arith.constant 0 : index
    %330 = vector.load %arg6[%c0_96, %c0_97] : memref<32x128xbf16, #tpu.memory_space<vmem>>, vector<32x128xbf16>
    %cst_98 = arith.constant dense<0.000000e+00> : vector<8x128xf32>
    %331 = tpu.matmul %307, %330, %cst_98 {dimension_numbers = #tpu.dot_dimension_numbers<[1], [0], [0], [1], [0, 0, 1, 1], [], []>} : vector<8x32xbf16>, vector<32x128xbf16>, vector<8x128xf32> -> vector<8x128xf32>
    %332 = arith.addf %329, %331 : vector<8x128xf32>
    %333 = arith.addf %332, %9 : vector<8x128xf32>
    %334 = arith.negf %333 : vector<8x128xf32>
    %335 = math.exp %334 : vector<8x128xf32>
    %cst_99 = arith.constant 1.000000e+00 : f32
    %336 = vector.broadcast %cst_99 : f32 to vector<8x128xf32>
    %337 = arith.addf %336, %335 : vector<8x128xf32>
    %338 = arith.divf %336, %337 : vector<8x128xf32>
    %339 = vector.extract_strided_slice %338 {offsets = [0, 0], sizes = [8, 32], strides = [1, 1]} : vector<8x128xf32> to vector<8x32xf32>
    %340 = vector.extract_strided_slice %338 {offsets = [0, 32], sizes = [8, 32], strides = [1, 1]} : vector<8x128xf32> to vector<8x32xf32>
    %341 = vector.extract_strided_slice %338 {offsets = [0, 96], sizes = [8, 32], strides = [1, 1]} : vector<8x128xf32> to vector<8x32xf32>
    %342 = vector.extract_strided_slice %333 {offsets = [0, 64], sizes = [8, 32], strides = [1, 1]} : vector<8x128xf32> to vector<8x32xf32>
    %343 = math.tanh %342 : vector<8x32xf32>
    %344 = arith.mulf %340, %304 : vector<8x32xf32>
    %345 = arith.mulf %339, %343 : vector<8x32xf32>
    %346 = arith.addf %344, %345 : vector<8x32xf32>
    %347 = math.tanh %346 : vector<8x32xf32>
    %348 = arith.mulf %341, %347 : vector<8x32xf32>
    %349 = arith.truncf %348 : vector<8x32xf32> to vector<8x32xbf16>
    %c0_100 = arith.constant 0 : index
    %c0_101 = arith.constant 0 : index
    %350 = vector.load %arg8[%c0_100, %c0_101] : memref<32x10xbf16, #tpu.memory_space<vmem>>, vector<32x10xbf16>
    %cst_102 = arith.constant dense<0.000000e+00> : vector<8x10xf32>
    %351 = tpu.matmul %349, %350, %cst_102 {dimension_numbers = #tpu.dot_dimension_numbers<[1], [0], [0], [1], [0, 0, 1, 1], [], []>} : vector<8x32xbf16>, vector<32x10xbf16>, vector<8x10xf32> -> vector<8x10xf32>
    %c0_103 = arith.constant 0 : index
    %c0_104 = arith.constant 0 : index
    %352 = vector.load %arg9[%c0_103, %c0_104] : memref<1x10xf32, #tpu.memory_space<vmem>>, vector<1x10xf32>
    %353 = vector.broadcast %352 : vector<1x10xf32> to vector<8x10xf32>
    %354 = arith.addf %351, %353 : vector<8x10xf32>
    %c0_105 = arith.constant 0 : index
    %c0_106 = arith.constant 0 : index
    %355 = vector.load %arg10[%c0_105, %c0_106] : memref<8x10xf32, #tpu.memory_space<vmem>>, vector<8x10xf32>
    tpu.vector_store %arg10[%c0_105, %c0_106], %354 {strides = array<i32>} : memref<8x10xf32, #tpu.memory_space<vmem>>, vector<8x10xf32>,
    return
  }
  func.func @transform_0(%arg0: i32) -> (i32, i32, i32) {
    %c0_i32 = arith.constant 0 : i32
    %c0_i32_0 = arith.constant 0 : i32
    %c0_i32_1 = arith.constant 0 : i32
    return %c0_i32, %arg0, %c0_i32_0 : i32, i32, i32
  }
  func.func @transform_1(%arg0: i32) -> (i32, i32) {
    %c0_i32 = arith.constant 0 : i32
    %c0_i32_0 = arith.constant 0 : i32
    %c0_i32_1 = arith.constant 0 : i32
    return %c0_i32, %c0_i32_0 : i32, i32
  }
  func.func @transform_2(%arg0: i32) -> (i32, i32) {
    %c0_i32 = arith.constant 0 : i32
    %c0_i32_0 = arith.constant 0 : i32
    %c0_i32_1 = arith.constant 0 : i32
    return %c0_i32, %c0_i32_0 : i32, i32
  }
  func.func @transform_3(%arg0: i32) -> (i32, i32) {
    %c0_i32 = arith.constant 0 : i32
    %c0_i32_0 = arith.constant 0 : i32
    %c0_i32_1 = arith.constant 0 : i32
    return %c0_i32, %c0_i32_0 : i32, i32
  }
  func.func @transform_4(%arg0: i32) -> (i32, i32) {
    %c0_i32 = arith.constant 0 : i32
    %c0_i32_0 = arith.constant 0 : i32
    %c0_i32_1 = arith.constant 0 : i32
    return %c0_i32, %c0_i32_0 : i32, i32
  }
  func.func @transform_5(%arg0: i32) -> (i32, i32) {
    %c0_i32 = arith.constant 0 : i32
    %c0_i32_0 = arith.constant 0 : i32
    %c0_i32_1 = arith.constant 0 : i32
    return %c0_i32, %c0_i32_0 : i32, i32
  }
  func.func @transform_6(%arg0: i32) -> (i32, i32) {
    %c0_i32 = arith.constant 0 : i32
    %c0_i32_0 = arith.constant 0 : i32
    %c0_i32_1 = arith.constant 0 : i32
    return %c0_i32, %c0_i32_0 : i32, i32
  }
  func.func @transform_7(%arg0: i32) -> (i32, i32) {
    %c0_i32 = arith.constant 0 : i32
    %c0_i32_0 = arith.constant 0 : i32
    %c0_i32_1 = arith.constant 0 : i32
    return %c0_i32, %c0_i32_0 : i32, i32
  }
  func.func @transform_8(%arg0: i32) -> (i32, i32) {
    %c0_i32 = arith.constant 0 : i32
    %c0_i32_0 = arith.constant 0 : i32
    %c0_i32_1 = arith.constant 0 : i32
    return %c0_i32, %c0_i32_0 : i32, i32
  }
  func.func @transform_9(%arg0: i32) -> (i32, i32) {
    %c0_i32 = arith.constant 0 : i32
    %c0_i32_0 = arith.constant 0 : i32
    return %arg0, %c0_i32 : i32, i32
  }
}

</mosaic_0001>

<llo_original>
// kernel: tpu_custom_call.1
$region0: #{tpu_custom_call.1}
  #allocation0 [shape = 'u32[]', space=smem, size = 0x4, offset = 0x4, fixed_abs, tag = 'smem constant byte address 0x4 - core index']
  #allocation1 [shape = 'u32[72,128]{1,0:T(1,128)}', space=vmem, size = 0x9000, scoped, tag = 'internal scratch']
  %s0 = inlined_call_operand.hbm [shape: bf16[8,16,28], index: 0, kind: input, shape index: {}]
  %s1 = inlined_call_operand.vmem [shape: bf16[28,128], index: 1, kind: input, shape index: {}]
  %s2 = inlined_call_operand.hbm [shape: bf16[32,128], index: 2, kind: input, shape index: {}]
  %s3 = inlined_call_operand.vmem [shape: f32[1,128], index: 3, kind: input, shape index: {}]
  %s4 = inlined_call_operand.hbm [shape: bf16[32,128], index: 4, kind: input, shape index: {}]
  %s5 = inlined_call_operand.hbm [shape: bf16[32,128], index: 5, kind: input, shape index: {}]
  %s6 = inlined_call_operand.vmem [shape: f32[1,128], index: 6, kind: input, shape index: {}]
  %s7 = inlined_call_operand.vmem [shape: bf16[32,10], index: 7, kind: input, shape index: {}]
  %s8 = inlined_call_operand.vmem [shape: f32[1,10], index: 8, kind: input, shape index: {}]
  %s9 = inlined_call_operand.hbm [shape: f32[16,10], index: 9, kind: output, shape index: {}]
  %s10 = sld [smem:[#allocation0]]
  $region85: #{tpu_custom_call.1} parent=0
    _
  %s12 = ssub.s32 1, %s10
  %s13 = scalar_select 0, %s12, %s10
  $region1: #{tpu_custom_call.1} parent=0
    #allocation2 [shape = 'u8[32768]{0}', space=vmem, size = 0x8000, scoped, tag = 'input window, operand 0']
    #allocation3 [shape = 's32[2]{0}', space=sflag, size = 0x8, scoped, tag = 'scoped memory for tpu_custom_call.1']
    #allocation4 [shape = 's32[2]{0}', space=sflag, size = 0x8, scoped, tag = 'scoped memory for tpu_custom_call.1']
    #allocation5 [shape = 'u8[8192]{0}', space=vmem, size = 0x2000, scoped, tag = 'input window, operand 2, single buffered']
    #allocation6 [shape = 's32[1]{0}', space=sflag, size = 0x4, scoped, tag = 'scoped memory for tpu_custom_call.1']
    #allocation7 [shape = 'u8[8192]{0}', space=vmem, size = 0x2000, scoped, tag = 'input window, operand 4, single buffered']
    #allocation8 [shape = 'u8[8192]{0}', space=vmem, size = 0x2000, scoped, tag = 'input window, operand 5, single buffered']
    #allocation9 [shape = 's32[1]{0}', space=sflag, size = 0x4, scoped, tag = 'scoped memory for tpu_custom_call.1']
    #allocation10 [shape = 'u8[8192]{0}', space=vmem, size = 0x2000, scoped, tag = 'output window, operand 0']
    %14 = vsyncpa [#allocation3], 0
    %s15 = scalar_lea.sflag [#allocation3], 1
    %16 = vsyncpa %s15, 0
    %17 = vsyncpa [#allocation6], 0
    %18 = vsyncpa [#allocation9], 0
    %19 = vsyncpa [#allocation4], 0
    %s20 = scalar_lea.sflag [#allocation4], 1
    %21 = vsyncpa %s20, 0
    loop: start=0, step=1, limit=4
    $region2: #{tpu_custom_call.1} parent=1 // loop_pre_header
      _
    $region3: #{tpu_custom_call.1} parent=1 // loop_header
      %s23 = sphi 0, %s27
      %p24 = scmp.ge.s32.totalorder %s23, 4
      %s33 = sphi 0, %s35
      %s36 = sphi 0, %s33
      %s37 = sphi 0, %s36
      %s53 = sphi 0, %s37
      %s57 = sphi 0, %s57
      %s59 = sphi 0, %s57
      %s60 = sphi 0, %s59
      %s74 = sphi 0, %s60
      %s78 = sphi 0, %s78
      %s80 = sphi 0, %s78
      %s81 = sphi 0, %s80
      %s95 = sphi 0, %s81
      %s99 = sphi 0, %s99
      %s101 = sphi 0, %s99
      %s102 = sphi 0, %s101
      %s116 = sphi 0, %s102
      %s120 = sphi 0, %s120
      %s122 = sphi 0, %s120
      %s123 = sphi 0, %s122
      %s137 = sphi 0, %s123
      %s141 = sphi 0, %s141
      %s143 = sphi 0, %s141
      %s144 = sphi 0, %s143
      %s158 = sphi 0, %s144
      %s162 = sphi 0, %s162
      %s164 = sphi 0, %s162
      %s165 = sphi 0, %s164
      %s179 = sphi 0, %s165
      %s183 = sphi 0, %s183
      %s185 = sphi 0, %s183
      %s186 = sphi 0, %s185
      %s200 = sphi 0, %s186
      %s204 = sphi 0, %s204
      %s206 = sphi 0, %s204
      %s207 = sphi 0, %s206
      %s221 = sphi 0, %s207
      %s227 = sphi 0, %s229
      %s230 = sphi 0, %s227
      %s231 = sphi 0, %s230
      %s247 = sphi 0, %s231
    $region4: #{tpu_custom_call.1} parent=1 // loop_header_branch
      %26 = sbr.rel (%p24) target = $region8
    $region5: #{tpu_custom_call.1} parent=1 // loop_body
      %s28 = ssub.s32 %s23, 1
      %s29 = ssub.s32 %s23, 2
      %s30 = sadd.s32 %s23, 1
      %s31 = ssub.s32 %s23, %s30
      %p32 = scmp.eq.s32.totalorder %s31, 0
      %s34 = sadd.s32 %s33, 1
      %s35 = scalar_select %p32, %s33, %s34
      %p38 = pneg %p32
      %p39 = scmp.eq.s32.totalorder %s23, 1
      %p40 = por %p38, %p39
      %p41 = scmp.ne.s32.totalorder %s33, %s36
      %p42 = scmp.eq.s32.totalorder %s23, 0
      %p43 = por %p41, %p42
      %p44 = scmp.ne.s32.totalorder %s33, %s36
      %p45 = scmp.eq.s32.totalorder %s28, 1
      %p46 = por %p44, %p45
      %p47 = scmp.ne.s32.totalorder %s36, %s37
      %p48 = scmp.eq.s32.totalorder %s28, 0
      %p49 = por %p47, %p48
      %p50 = scmp.ne.s32.totalorder %s36, %s37
      %p51 = scmp.eq.s32.totalorder %s29, 1
      %p52 = por %p50, %p51
      %p54 = scmp.ne.s32.totalorder %s37, %s53
      %p55 = scmp.eq.s32.totalorder %s29, 0
      %p56 = por %p54, %p55
      %s58 = sadd.s32 %s57, 1
      %p61 = scmp.eq.s32.totalorder %s23, 1
      %p62 = scmp.ne.s32.totalorder %s57, %s59
      %p63 = scmp.eq.s32.totalorder %s23, 0
      %p64 = por %p62, %p63
      %p65 = scmp.ne.s32.totalorder %s57, %s59
      %p66 = scmp.eq.s32.totalorder %s28, 1
      %p67 = por %p65, %p66
      %p68 = scmp.ne.s32.totalorder %s59, %s60
      %p69 = scmp.eq.s32.totalorder %s28, 0
      %p70 = por %p68, %p69
      %p71 = scmp.ne.s32.totalorder %s59, %s60
      %p72 = scmp.eq.s32.totalorder %s29, 1
      %p73 = por %p71, %p72
      %p75 = scmp.ne.s32.totalorder %s60, %s74
      %p76 = scmp.eq.s32.totalorder %s29, 0
      %p77 = por %p75, %p76
      %s79 = sadd.s32 %s78, 1
      %p82 = scmp.eq.s32.totalorder %s23, 1
      %p83 = scmp.ne.s32.totalorder %s78, %s80
      %p84 = scmp.eq.s32.totalorder %s23, 0
      %p85 = por %p83, %p84
      %p86 = scmp.ne.s32.totalorder %s78, %s80
      %p87 = scmp.eq.s32.totalorder %s28, 1
      %p88 = por %p86, %p87
      %p89 = scmp.ne.s32.totalorder %s80, %s81
      %p90 = scmp.eq.s32.totalorder %s28, 0
      %p91 = por %p89, %p90
      %p92 = scmp.ne.s32.totalorder %s80, %s81
      %p93 = scmp.eq.s32.totalorder %s29, 1
      %p94 = por %p92, %p93
      %p96 = scmp.ne.s32.totalorder %s81, %s95
      %p97 = scmp.eq.s32.totalorder %s29, 0
      %p98 = por %p96, %p97
      %s100 = sadd.s32 %s99, 1
      %p103 = scmp.eq.s32.totalorder %s23, 1
      %p104 = scmp.ne.s32.totalorder %s99, %s101
      %p105 = scmp.eq.s32.totalorder %s23, 0
      %p106 = por %p104, %p105
      %p107 = scmp.ne.s32.totalorder %s99, %s101
      %p108 = scmp.eq.s32.totalorder %s28, 1
      %p109 = por %p107, %p108
      %p110 = scmp.ne.s32.totalorder %s101, %s102
      %p111 = scmp.eq.s32.totalorder %s28, 0
      %p112 = por %p110, %p111
      %p113 = scmp.ne.s32.totalorder %s101, %s102
      %p114 = scmp.eq.s32.totalorder %s29, 1
      %p115 = por %p113, %p114
      %p117 = scmp.ne.s32.totalorder %s102, %s116
      %p118 = scmp.eq.s32.totalorder %s29, 0
      %p119 = por %p117, %p118
      %s121 = sadd.s32 %s120, 1
      %p124 = scmp.eq.s32.totalorder %s23, 1
      %p125 = scmp.ne.s32.totalorder %s120, %s122
      %p126 = scmp.eq.s32.totalorder %s23, 0
      %p127 = por %p125, %p126
      %p128 = scmp.ne.s32.totalorder %s120, %s122
      %p129 = scmp.eq.s32.totalorder %s28, 1
      %p130 = por %p128, %p129
      %p131 = scmp.ne.s32.totalorder %s122, %s123
      %p132 = scmp.eq.s32.totalorder %s28, 0
      %p133 = por %p131, %p132
      %p134 = scmp.ne.s32.totalorder %s122, %s123
      %p135 = scmp.eq.s32.totalorder %s29, 1
      %p136 = por %p134, %p135
      %p138 = scmp.ne.s32.totalorder %s123, %s137
      %p139 = scmp.eq.s32.totalorder %s29, 0
      %p140 = por %p138, %p139
      %s142 = sadd.s32 %s141, 1
      %p145 = scmp.eq.s32.totalorder %s23, 1
      %p146 = scmp.ne.s32.totalorder %s141, %s143
      %p147 = scmp.eq.s32.totalorder %s23, 0
      %p148 = por %p146, %p147
      %p149 = scmp.ne.s32.totalorder %s141, %s143
      %p150 = scmp.eq.s32.totalorder %s28, 1
      %p151 = por %p149, %p150
      %p152 = scmp.ne.s32.totalorder %s143, %s144
      %p153 = scmp.eq.s32.totalorder %s28, 0
      %p154 = por %p152, %p153
      %p155 = scmp.ne.s32.totalorder %s143, %s144
      %p156 = scmp.eq.s32.totalorder %s29, 1
      %p157 = por %p155, %p156
      %p159 = scmp.ne.s32.totalorder %s144, %s158
      %p160 = scmp.eq.s32.totalorder %s29, 0
      %p161 = por %p159, %p160
      %s163 = sadd.s32 %s162, 1
      %p166 = scmp.eq.s32.totalorder %s23, 1
      %p167 = scmp.ne.s32.totalorder %s162, %s164
      %p168 = scmp.eq.s32.totalorder %s23, 0
      %p169 = por %p167, %p168
      %p170 = scmp.ne.s32.totalorder %s162, %s164
      %p171 = scmp.eq.s32.totalorder %s28, 1
      %p172 = por %p170, %p171
      %p173 = scmp.ne.s32.totalorder %s164, %s165
      %p174 = scmp.eq.s32.totalorder %s28, 0
      %p175 = por %p173, %p174
      %p176 = scmp.ne.s32.totalorder %s164, %s165
      %p177 = scmp.eq.s32.totalorder %s29, 1
      %p178 = por %p176, %p177
      %p180 = scmp.ne.s32.totalorder %s165, %s179
      %p181 = scmp.eq.s32.totalorder %s29, 0
      %p182 = por %p180, %p181
      %s184 = sadd.s32 %s183, 1
      %p187 = scmp.eq.s32.totalorder %s23, 1
      %p188 = scmp.ne.s32.totalorder %s183, %s185
      %p189 = scmp.eq.s32.totalorder %s23, 0
      %p190 = por %p188, %p189
      %p191 = scmp.ne.s32.totalorder %s183, %s185
      %p192 = scmp.eq.s32.totalorder %s28, 1
      %p193 = por %p191, %p192
      %p194 = scmp.ne.s32.totalorder %s185, %s186
      %p195 = scmp.eq.s32.totalorder %s28, 0
      %p196 = por %p194, %p195
      %p197 = scmp.ne.s32.totalorder %s185, %s186
      %p198 = scmp.eq.s32.totalorder %s29, 1
      %p199 = por %p197, %p198
      %p201 = scmp.ne.s32.totalorder %s186, %s200
      %p202 = scmp.eq.s32.totalorder %s29, 0
      %p203 = por %p201, %p202
      %s205 = sadd.s32 %s204, 1
      %p208 = scmp.eq.s32.totalorder %s23, 1
      %p209 = scmp.ne.s32.totalorder %s204, %s206
      %p210 = scmp.eq.s32.totalorder %s23, 0
      %p211 = por %p209, %p210
      %p212 = scmp.ne.s32.totalorder %s204, %s206
      %p213 = scmp.eq.s32.totalorder %s28, 1
      %p214 = por %p212, %p213
      %p215 = scmp.ne.s32.totalorder %s206, %s207
      %p216 = scmp.eq.s32.totalorder %s28, 0
      %p217 = por %p215, %p216
      %p218 = scmp.ne.s32.totalorder %s206, %s207
      %p219 = scmp.eq.s32.totalorder %s29, 1
      %p220 = por %p218, %p219
      %p222 = scmp.ne.s32.totalorder %s207, %s221
      %p223 = scmp.eq.s32.totalorder %s29, 0
      %p224 = por %p222, %p223
      %s225 = ssub.s32 %s23, %s30
      %p226 = scmp.eq.s32.totalorder %s225, 0
      %s228 = sadd.s32 %s227, 1
      %s229 = scalar_select %p226, %s227, %s228
      %p232 = pneg %p226
      %p233 = scmp.eq.s32.totalorder %s23, 1
      %p234 = por %p232, %p233
      %p235 = scmp.ne.s32.totalorder %s227, %s230
      %p236 = scmp.eq.s32.totalorder %s23, 0
      %p237 = por %p235, %p236
      %p238 = scmp.ne.s32.totalorder %s227, %s230
      %p239 = scmp.eq.s32.totalorder %s28, 1
      %p240 = por %p238, %p239
      %p241 = scmp.ne.s32.totalorder %s230, %s231
      %p242 = scmp.eq.s32.totalorder %s28, 0
      %p243 = por %p241, %p242
      %p244 = scmp.ne.s32.totalorder %s230, %s231
      %p245 = scmp.eq.s32.totalorder %s29, 1
      %p246 = por %p244, %p245
      %p248 = scmp.ne.s32.totalorder %s231, %s247
      %p249 = scmp.eq.s32.totalorder %s29, 0
      %p250 = por %p248, %p249
      %p251 = scmp.le.s32.totalorder 1, %s23
      %p252 = scmp.lt.s32.totalorder %s23, 3
      %p253 = pnand %p251, %p252
      %p254 = pneg %p253
      // Predicated region
      $region9: #{tpu_custom_call.1} parent=5 // pred_check
        _
      $region10: #{tpu_custom_call.1} parent=5 // pred_check_branch
        %256 = sbr.rel (%p253) target = $region12
      $region11: #{tpu_custom_call.1} parent=5 // pred_region
        %s257 = ssub.s32 %s23, 1
        // Predicated region
        $region13: #{tpu_custom_call.1} parent=11 // pred_check
          %p258 = pneg %p70
        $region14: #{tpu_custom_call.1} parent=11 // pred_check_branch
          %260 = sbr.rel (%p258) target = $region16
        $region15: #{tpu_custom_call.1} parent=11 // pred_region
          _
        $region16: #{tpu_custom_call.1} parent=11 // pred_fallthru
          _
        // Predicated region
        $region17: #{tpu_custom_call.1} parent=11 // pred_check
          %p261 = pneg %p91
        $region18: #{tpu_custom_call.1} parent=11 // pred_check_branch
          %263 = sbr.rel (%p261) target = $region20
        $region19: #{tpu_custom_call.1} parent=11 // pred_region
          %265 = vsyncadd [#allocation6], 0
          %s266 = sshll.u32 %s2, 4
          %s267 = int_to_ptr.hbm [resolvable:$true] %s266
          %s268 = sshll.u32 [#allocation5], 4
          %s269 = int_to_ptr.vmem [resolvable:$true] %s268
          %274 = dma.hbm_to_vmem [thread:$0]  %s267, 256, %s269, [#allocation6], 64, 64, 4
        $region20: #{tpu_custom_call.1} parent=11 // pred_fallthru
          _
        // Predicated region
        $region21: #{tpu_custom_call.1} parent=11 // pred_check
          %p275 = pneg %p112
        $region22: #{tpu_custom_call.1} parent=11 // pred_check_branch
          %277 = sbr.rel (%p275) target = $region24
        $region23: #{tpu_custom_call.1} parent=11 // pred_region
          _
        $region24: #{tpu_custom_call.1} parent=11 // pred_fallthru
          _
        // Predicated region
        $region25: #{tpu_custom_call.1} parent=11 // pred_check
          %p278 = pneg %p133
        $region26: #{tpu_custom_call.1} parent=11 // pred_check_branch
          %280 = sbr.rel (%p278) target = $region28
        $region27: #{tpu_custom_call.1} parent=11 // pred_region
          %282 = vsyncadd [#allocation6], 0
          %s283 = sshll.u32 %s4, 4
          %s284 = int_to_ptr.hbm [resolvable:$true] %s283
          %s285 = sshll.u32 [#allocation7], 4
          %s286 = int_to_ptr.vmem [resolvable:$true] %s285
          %291 = dma.hbm_to_vmem [thread:$0]  %s284, 256, %s286, [#allocation6], 64, 64, 4
        $region28: #{tpu_custom_call.1} parent=11 // pred_fallthru
          _
        // Predicated region
        $region29: #{tpu_custom_call.1} parent=11 // pred_check
          %p292 = pneg %p154
        $region30: #{tpu_custom_call.1} parent=11 // pred_check_branch
          %294 = sbr.rel (%p292) target = $region32
        $region31: #{tpu_custom_call.1} parent=11 // pred_region
          %296 = vsyncadd [#allocation9], 0
          %s297 = sshll.u32 %s5, 4
          %s298 = int_to_ptr.hbm [resolvable:$true] %s297
          %s299 = sshll.u32 [#allocation8], 4
          %s300 = int_to_ptr.vmem [resolvable:$true] %s299
          %305 = dma.hbm_to_vmem [thread:$0]  %s298, 256, %s300, [#allocation9], 64, 64, 4
        $region32: #{tpu_custom_call.1} parent=11 // pred_fallthru
          _
        // Predicated region
        $region33: #{tpu_custom_call.1} parent=11 // pred_check
          %p306 = pneg %p175
        $region34: #{tpu_custom_call.1} parent=11 // pred_check_branch
          %308 = sbr.rel (%p306) target = $region36
        $region35: #{tpu_custom_call.1} parent=11 // pred_region
          _
        $region36: #{tpu_custom_call.1} parent=11 // pred_fallthru
          _
        // Predicated region
        $region37: #{tpu_custom_call.1} parent=11 // pred_check
          %p309 = pneg %p196
        $region38: #{tpu_custom_call.1} parent=11 // pred_check_branch
          %311 = sbr.rel (%p309) target = $region40
        $region39: #{tpu_custom_call.1} parent=11 // pred_region
          _
        $region40: #{tpu_custom_call.1} parent=11 // pred_fallthru
          _
        // Predicated region
        $region41: #{tpu_custom_call.1} parent=11 // pred_check
          %p312 = pneg %p217
        $region42: #{tpu_custom_call.1} parent=11 // pred_check_branch
          %314 = sbr.rel (%p312) target = $region44
        $region43: #{tpu_custom_call.1} parent=11 // pred_region
          _
        $region44: #{tpu_custom_call.1} parent=11 // pred_fallthru
          _
      $region12: #{tpu_custom_call.1} parent=5 // pred_fallthru
        _
      %p315 = scmp.lt.s32.totalorder %s23, 2
      // Predicated region
      $region45: #{tpu_custom_call.1} parent=5 // pred_check
        %p316 = pneg %p315
      $region46: #{tpu_custom_call.1} parent=5 // pred_check_branch
        %318 = sbr.rel (%p316) target = $region48
      $region47: #{tpu_custom_call.1} parent=5 // pred_region
        // Predicated region
        $region49: #{tpu_custom_call.1} parent=47 // pred_check
          %p319 = pneg %p43
        $region50: #{tpu_custom_call.1} parent=47 // pred_check_branch
          %321 = sbr.rel (%p319) target = $region52
        $region51: #{tpu_custom_call.1} parent=47 // pred_region
          %s322 = sand.u32 %s33, 1
          %s323 = scalar_lea.sflag [#allocation3], %s322
          %s324 = sand.u32 %s33, 1
          %s325 = smul.addr %s324, 32
          %s326 = scalar_lea.vmem [#allocation2], %s325
          %328 = vsyncadd %s323, 0
          %s329 = smul.addr %s23, 4
          %s330 = scalar_lea.hbm %s0, %s329
          %s331 = sshll.u32 %s330, 4
          %s332 = int_to_ptr.hbm [resolvable:$true] %s331
          %s333 = sshll.u32 %s326, 4
          %s334 = int_to_ptr.vmem [resolvable:$true] %s333
          %339 = dma.hbm_to_vmem [thread:$0]  %s332, 512, %s334, %s323, 128, 64, 4
        $region52: #{tpu_custom_call.1} parent=47 // pred_fallthru
          _
      $region48: #{tpu_custom_call.1} parent=5 // pred_fallthru
        _
      %p340 = scmp.le.s32.totalorder 1, %s23
      %p341 = scmp.lt.s32.totalorder %s23, 3
      %p342 = pnand %p340, %p341
      %p343 = pneg %p342
      // Predicated region
      $region53: #{tpu_custom_call.1} parent=5 // pred_check
        _
      $region54: #{tpu_custom_call.1} parent=5 // pred_check_branch
        %345 = sbr.rel (%p342) target = $region56
      $region55: #{tpu_custom_call.1} parent=5 // pred_region
        %s346 = ssub.s32 %s23, 1
        %s347 = sand.u32 %s36, 1
        %s348 = scalar_lea.sflag [#allocation3], %s347
        %s349 = sand.u32 %s36, 1
        %s350 = smul.addr %s349, 32
        %s351 = scalar_lea.vmem [#allocation2], %s350
        // Predicated region
        $region57: #{tpu_custom_call.1} parent=55 // pred_check
          %p352 = pneg %p49
        $region58: #{tpu_custom_call.1} parent=55 // pred_check_branch
          %354 = sbr.rel (%p352) target = $region60
        $region59: #{tpu_custom_call.1} parent=55 // pred_region
          %356 = dma.done %s348, 512
        $region60: #{tpu_custom_call.1} parent=55 // pred_fallthru
          _
        // Predicated region
        $region61: #{tpu_custom_call.1} parent=55 // pred_check
          %p357 = pneg %p91
        $region62: #{tpu_custom_call.1} parent=55 // pred_check_branch
          %359 = sbr.rel (%p357) target = $region64
        $region63: #{tpu_custom_call.1} parent=55 // pred_region
          %361 = dma.done [#allocation6], 256
        $region64: #{tpu_custom_call.1} parent=55 // pred_fallthru
          _
        // Predicated region
        $region65: #{tpu_custom_call.1} parent=55 // pred_check
          %p362 = pneg %p133
        $region66: #{tpu_custom_call.1} parent=55 // pred_check_branch
          %364 = sbr.rel (%p362) target = $region68
        $region67: #{tpu_custom_call.1} parent=55 // pred_region
          %366 = dma.done [#allocation6], 256
        $region68: #{tpu_custom_call.1} parent=55 // pred_fallthru
          _
        // Predicated region
        $region69: #{tpu_custom_call.1} parent=55 // pred_check
          %p367 = pneg %p154
        $region70: #{tpu_custom_call.1} parent=55 // pred_check_branch
          %369 = sbr.rel (%p367) target = $region72
        $region71: #{tpu_custom_call.1} parent=55 // pred_region
          %371 = dma.done [#allocation9], 256
        $region72: #{tpu_custom_call.1} parent=55 // pred_fallthru
          _
        %s372 = sand.u32 %s36, 1
        %s373 = scalar_lea.sflag [#allocation3], %s372
        %s374 = sand.u32 %s36, 1
        %s375 = smul.addr %s374, 32
        %s376 = scalar_lea.vmem [#allocation2], %s375
        %p377 = pneg %p49
        %p378 = pneg %p46
        %p379 = pneg %p70
        %p380 = pneg %p67
        %p381 = pneg %p91
        %p382 = pneg %p88
        %p383 = pneg %p112
        %p384 = pneg %p109
        %p385 = pneg %p133
        %p386 = pneg %p130
        %p387 = pneg %p154
        %p388 = pneg %p151
        %p389 = pneg %p175
        %p390 = pneg %p172
        %p391 = pneg %p196
        %p392 = pneg %p193
        %p393 = pneg %p217
        %p394 = pneg %p214
        %p395 = pneg %p243
        %p396 = pneg %p240
        %s397 = sand.u32 %s230, 1
        %s398 = scalar_lea.sflag [#allocation4], %s397
        %s399 = sand.u32 %s230, 1
        %s400 = smul.addr %s399, 8
        %s401 = scalar_lea.vmem [#allocation10], %s400
        %v403 = vld [vmem:[%s351] sm:$0xf]
        %v404 = vld [vmem:[%s351 + $0x4] sm:$0xf]
        %v405 = vld [vmem:[%s351 + $0x8] sm:$0xf]
        %v406 = vld [vmem:[%s351 + $0xc] sm:$0xf]
        %v407 = vld [vmem:[%s351 + $0x10] sm:$0xf]
        %v408 = vld [vmem:[%s351 + $0x14] sm:$0xf]
        %v409 = vld [vmem:[%s351 + $0x18] sm:$0xf]
        %v410 = vld [vmem:[%s351 + $0x1c] sm:$0xf]
        %v411 = vld [vmem:[%s1] sm:$0xf]
        %v412 = vld [vmem:[%s1 + $0x4] sm:$0xf]
        %v413 = vld [vmem:[%s1 + $0x8] sm:$0xf]
        %v414 = vld [vmem:[%s1 + $0xc] sm:$0x3]
        %v415 = vld [vmem:[%s3] sm:$0x1]
        %v417 = vperm.slane %v415, 0
        %v427 = vunpack.c.l.b16 %v403
        %v428 = vunpack.c.l.b16 %v404
        %v429 = vunpack.c.l.b16 %v405
        %v430 = vunpack.c.l.b16 %v406
        %v431 = vunpack.c.l.b16 %v407
        %v432 = vunpack.c.l.b16 %v408
        %v433 = vunpack.c.l.b16 %v409
        %v434 = vunpack.c.l.b16 %v410
        %v435 = vpack.c.b16 %v428, %v427
        %v436 = vpack.c.b16 %v430, %v429
        %v437 = vpack.c.b16 %v432, %v431
        %v438 = vpack.c.b16 %v434, %v433
        %v443 = vunpack.c.l.b16 %v411
        %v444 = vunpack.c.l.b16 %v412
        %v445 = vunpack.c.l.b16 %v413
        %v446 = vunpack.c.l.b16 %v414
        %v447 = vpack.c.b16 %v444, %v443
        %v448 = vpack.c.b16 %v446, %v445
        %vm450 = vcmask 228352
        %v452 = vsel %vm450, %v435, 0
        %v455 = vsel %vm450, %v436, 0
        %v458 = vsel %vm450, %v437, 0
        %v461 = vsel %vm450, %v438, 0
        %vm463 = vcmask 1045504
        %v465 = vsel %vm463, %v448, 0
        %467 = vmatpush.bf16.msra.mxu0 0
        %468 = vmatpush.bf16.msra.mxu0 0
        %469 = vmatpush.bf16.msra.mxu0 0
        %470 = vmatpush.bf16.msra.mxu0 0
        %471 = vmatpush.bf16.msra.mxu0 0
        %472 = vmatpush.bf16.msra.mxu0 0
        %473 = vmatpush.bf16.msra.mxu0 %v465
        %474 = vmatpush.bf16.msra.mxu0 %v447
        %475 = vmatmul.bf16.gmra.mxu0 %v452
        %v476 = vpop.f32.mrf.mxu0
        %v477 = vadd.f32 %v417, %v476
        %v478 = vpop.f32.mrf.mxu0
        %v479 = vadd.f32 %v417, %v478
        %480 = vmatmul.bf16.gmra.mxu0 %v455
        %v481 = vpop.f32.mrf.mxu0
        %v482 = vadd.f32 %v417, %v481
        %v483 = vpop.f32.mrf.mxu0
        %v484 = vadd.f32 %v417, %v483
        %485 = vmatmul.bf16.gmra.mxu0 %v458
        %v486 = vpop.f32.mrf.mxu0
        %v487 = vadd.f32 %v417, %v486
        %v488 = vpop.f32.mrf.mxu0
        %v489 = vadd.f32 %v417, %v488
        %490 = vmatmul.bf16.gmra.mxu0 %v461
        %v491 = vpop.f32.mrf.mxu0
        %v492 = vadd.f32 %v417, %v491
        %v493 = vpop.f32.mrf.mxu0
        %v494 = vadd.f32 %v417, %v493
        %495 = vdwg.mxu0
        %v496 = vld [vmem:[%s6] sm:$0x1]
        %v498 = vperm.slane %v496, 0
        %v500 = vld [vmem:[#allocation5] sm:$0xf]
        %v501 = vld [vmem:[#allocation5 + $0x4] sm:$0xf]
        %v502 = vld [vmem:[#allocation5 + $0x8] sm:$0xf]
        %v503 = vld [vmem:[#allocation5 + $0xc] sm:$0xf]
        %v508 = vunpack.c.l.b16 %v500
        %v509 = vunpack.c.l.b16 %v501
        %v510 = vunpack.c.l.b16 %v502
        %v511 = vunpack.c.l.b16 %v503
        %v512 = vpack.c.b16 %v509, %v508
        %v513 = vpack.c.b16 %v511, %v510
        %vm516 = vcmask 261120
        %v518 = vsel %vm516, 0, 0
        %520 = vmatpush.bf16.msra.mxu0 0
        %521 = vmatpush.bf16.msra.mxu0 0
        %522 = vmatpush.bf16.msra.mxu0 0
        %523 = vmatpush.bf16.msra.mxu0 0
        %524 = vmatpush.bf16.msra.mxu0 0
        %525 = vmatpush.bf16.msra.mxu0 0
        %526 = vmatpush.bf16.msra.mxu0 %v513
        %527 = vmatpush.bf16.msra.mxu0 %v512
        %528 = vmatmul.bf16.gmra.mxu0 %v518
        %v529 = vpop.f32.mrf.mxu0
        %v530 = vadd.f32 0.0, %v529
        %v531 = vpop.f32.mrf.mxu0
        %532 = vdwg.mxu0
        %v533 = vadd.f32 %v477, %v530
        %v534 = vxor.u32 %v533, 2147483648
        %v535 = vmul.f32 %v534, 1.442695
        %v536 = vpow.pop %v535
        %v537 = vadd.f32 %v536, 1.0
        %v538 = vrcp.pop %v537
        %v539 = vmul.f32 %v537, %v538
        %v540 = vsub.f32 1.0, %v539
        %v541 = vmul.f32 %v538, %v540
        %v542 = vadd.f32 %v538, %v541
        %vm543 = vweird.f32 %v537
        %vm544 = vweird.f32 %v538
        %vm545 = vmor %vm543, %vm544
        %v546 = vsel %vm545, %v538, %v542
        %v547 = vand.u32 2147483647, %v537
        %vm548 = vcmp.eq.f32.partialorder %v547, 8.507059e+37
        %v549 = vand.u32 %v537, 2147483648
        %v550 = vor.u32 1.1754944e-38, %v549
        %v551 = vsel %vm548, %v550, %v546
        %v552 = vmul.f32 1.0, %v551
        %v553 = vtanh.pop %v533
        %v554 = vmul.f32 %v552, 0.0
        %556 = vrot.lane.b32.xlu0 %v553, 64
        %v557 = vpop.permute.xlu0 %556
        %v559 = vmul.f32 %v552, %v557
        %561 = vrot.lane.b32.xlu0 %v559, 32
        %v562 = vpop.permute.xlu0 %561
        %v564 = vadd.f32 %v554, %v562
        %v565 = vtanh.pop %v564
        %567 = vrot.lane.b32.xlu0 %v565, 64
        %v568 = vpop.permute.xlu0 %567
        %v570 = vmul.f32 %v552, %v568
        %v571 = vpack.c.bf16 %v570, %v570
        %v572 = vld [vmem:[#allocation7] sm:$0xf]
        %v573 = vld [vmem:[#allocation7 + $0x4] sm:$0xf]
        %v574 = vld [vmem:[#allocation7 + $0x8] sm:$0xf]
        %v575 = vld [vmem:[#allocation7 + $0xc] sm:$0xf]
        %v576 = vld [vmem:[#allocation8] sm:$0xf]
        %v577 = vld [vmem:[#allocation8 + $0x4] sm:$0xf]
        %v578 = vld [vmem:[#allocation8 + $0x8] sm:$0xf]
        %v579 = vld [vmem:[#allocation8 + $0xc] sm:$0xf]
        %v584 = vunpack.c.l.b16 %v576
        %v585 = vunpack.c.l.b16 %v577
        %v586 = vunpack.c.l.b16 %v578
        %v587 = vunpack.c.l.b16 %v579
        %v588 = vpack.c.b16 %v585, %v584
        %v589 = vpack.c.b16 %v587, %v586
        %592 = vmatpush.bf16.msra.mxu0 0
        %593 = vmatpush.bf16.msra.mxu0 0
        %594 = vmatpush.bf16.msra.mxu0 0
        %595 = vmatpush.bf16.msra.mxu0 0
        %596 = vmatpush.bf16.msra.mxu0 0
        %597 = vmatpush.bf16.msra.mxu0 0
        %598 = vmatpush.bf16.msra.mxu0 %v589
        %599 = vmatpush.bf16.msra.mxu0 %v588
        %600 = vmatmul.bf16.gmra.mxu0 %v518
        %v601 = vpop.f32.mrf.mxu0
        %v602 = vadd.f32 0.0, %v601
        %v603 = vpop.f32.mrf.mxu0
        %604 = vdwg.mxu0
        %606 = vrot.lane.b32.xlu0 %v571, 32
        %v607 = vpop.permute.xlu0 %606
        %v612 = vunpack.c.l.b16 %v572
        %v613 = vunpack.c.l.b16 %v573
        %v614 = vunpack.c.l.b16 %v574
        %v615 = vunpack.c.l.b16 %v575
        %v616 = vpack.c.b16 %v613, %v612
        %v617 = vpack.c.b16 %v615, %v614
        %v621 = vsel %vm516, %v607, 0
        %623 = vmatpush.bf16.msra.mxu0 0
        %624 = vmatpush.bf16.msra.mxu0 0
        %625 = vmatpush.bf16.msra.mxu0 0
        %626 = vmatpush.bf16.msra.mxu0 0
        %627 = vmatpush.bf16.msra.mxu0 0
        %628 = vmatpush.bf16.msra.mxu0 0
        %629 = vmatpush.bf16.msra.mxu0 %v617
        %630 = vmatpush.bf16.msra.mxu0 %v616
        %631 = vmatmul.bf16.gmra.mxu0 %v621
        %v632 = vpop.f32.mrf.mxu0
        %v633 = vadd.f32 %v602, %v632
        %v634 = vpop.f32.mrf.mxu0
        %635 = vdwg.mxu0
        %v636 = vadd.f32 %v633, %v498
        %v637 = vxor.u32 %v636, 2147483648
        %v638 = vmul.f32 %v637, 1.442695
        %v639 = vpow.pop %v638
        %v640 = vadd.f32 %v639, 1.0
        %v641 = vrcp.pop %v640
        %v642 = vmul.f32 %v640, %v641
        %v643 = vsub.f32 1.0, %v642
        %v644 = vmul.f32 %v641, %v643
        %v645 = vadd.f32 %v641, %v644
        %vm646 = vweird.f32 %v640
        %vm647 = vweird.f32 %v641
        %vm648 = vmor %vm646, %vm647
        %v649 = vsel %vm648, %v641, %v645
        %v650 = vand.u32 2147483647, %v640
        %vm651 = vcmp.eq.f32.partialorder %v650, 8.507059e+37
        %v652 = vand.u32 %v640, 2147483648
        %v653 = vor.u32 1.1754944e-38, %v652
        %v654 = vsel %vm651, %v653, %v649
        %v655 = vmul.f32 1.0, %v654
        %v656 = vtanh.pop %v636
        %v657 = vmul.f32 %v655, 0.0
        %659 = vrot.lane.b32.xlu0 %v656, 64
        %v660 = vpop.permute.xlu0 %659
        %v662 = vmul.f32 %v655, %v660
        %664 = vrot.lane.b32.xlu0 %v662, 32
        %v665 = vpop.permute.xlu0 %664
        %v667 = vadd.f32 %v657, %v665
        %v668 = vtanh.pop %v667
        %670 = vrot.lane.b32.xlu0 %v668, 64
        %v671 = vpop.permute.xlu0 %670
        %v673 = vmul.f32 %v655, %v671
        %v674 = vpack.c.bf16 %v673, %v673
        %675 = vmatpush.bf16.msra.mxu0 0
        %676 = vmatpush.bf16.msra.mxu0 0
        %677 = vmatpush.bf16.msra.mxu0 0
        %678 = vmatpush.bf16.msra.mxu0 0
        %679 = vmatpush.bf16.msra.mxu0 0
        %680 = vmatpush.bf16.msra.mxu0 0
        %681 = vmatpush.bf16.msra.mxu0 %v513
        %682 = vmatpush.bf16.msra.mxu0 %v512
        %683 = vmatmul.bf16.gmra.mxu0 %v621
        %v684 = vpop.f32.mrf.mxu0
        %v685 = vadd.f32 0.0, %v684
        %v686 = vpop.f32.mrf.mxu0
        %687 = vdwg.mxu0
        %v688 = vadd.f32 %v479, %v685
        %v689 = vxor.u32 %v688, 2147483648
        %v690 = vmul.f32 %v689, 1.442695
        %v691 = vpow.pop %v690
        %v692 = vadd.f32 %v691, 1.0
        %v693 = vrcp.pop %v692
        %v694 = vmul.f32 %v692, %v693
        %v695 = vsub.f32 1.0, %v694
        %v696 = vmul.f32 %v693, %v695
        %v697 = vadd.f32 %v693, %v696
        %vm698 = vweird.f32 %v692
        %vm699 = vweird.f32 %v693
        %vm700 = vmor %vm698, %vm699
        %v701 = vsel %vm700, %v693, %v697
        %v702 = vand.u32 2147483647, %v692
        %vm703 = vcmp.eq.f32.partialorder %v702, 8.507059e+37
        %v704 = vand.u32 %v692, 2147483648
        %v705 = vor.u32 1.1754944e-38, %v704
        %v706 = vsel %vm703, %v705, %v701
        %v707 = vmul.f32 1.0, %v706
        %v708 = vtanh.pop %v688
        %v709 = vmul.f32 %v707, %v564
        %711 = vrot.lane.b32.xlu0 %v708, 64
        %v712 = vpop.permute.xlu0 %711
        %v714 = vmul.f32 %v707, %v712
        %716 = vrot.lane.b32.xlu0 %v714, 32
        %v717 = vpop.permute.xlu0 %716
        %v719 = vadd.f32 %v709, %v717
        %v720 = vtanh.pop %v719
        %722 = vrot.lane.b32.xlu0 %v720, 64
        %v723 = vpop.permute.xlu0 %722
        %v725 = vmul.f32 %v707, %v723
        %v726 = vpack.c.bf16 %v725, %v725
        %728 = vrot.lane.b32.xlu0 %v674, 32
        %v729 = vpop.permute.xlu0 %728
        %v731 = vsel %vm516, %v729, 0
        %733 = vmatpush.bf16.msra.mxu0 0
        %734 = vmatpush.bf16.msra.mxu0 0
        %735 = vmatpush.bf16.msra.mxu0 0
        %736 = vmatpush.bf16.msra.mxu0 0
        %737 = vmatpush.bf16.msra.mxu0 0
        %738 = vmatpush.bf16.msra.mxu0 0
        %739 = vmatpush.bf16.msra.mxu0 %v589
        %740 = vmatpush.bf16.msra.mxu0 %v588
        %741 = vmatmul.bf16.gmra.mxu0 %v731
        %v742 = vpop.f32.mrf.mxu0
        %v743 = vadd.f32 0.0, %v742
        %v744 = vpop.f32.mrf.mxu0
        %745 = vdwg.mxu0
        %747 = vrot.lane.b32.xlu0 %v726, 32
        %v748 = vpop.permute.xlu0 %747
        %v750 = vsel %vm516, %v748, 0
        %752 = vmatpush.bf16.msra.mxu0 0
        %753 = vmatpush.bf16.msra.mxu0 0
        %754 = vmatpush.bf16.msra.mxu0 0
        %755 = vmatpush.bf16.msra.mxu0 0
        %756 = vmatpush.bf16.msra.mxu0 0
        %757 = vmatpush.bf16.msra.mxu0 0
        %758 = vmatpush.bf16.msra.mxu0 %v617
        %759 = vmatpush.bf16.msra.mxu0 %v616
        %760 = vmatmul.bf16.gmra.mxu0 %v750
        %v761 = vpop.f32.mrf.mxu0
        %v762 = vadd.f32 %v743, %v761
        %v763 = vpop.f32.mrf.mxu0
        %764 = vdwg.mxu0
        %v765 = vadd.f32 %v762, %v498
        %v766 = vxor.u32 %v765, 2147483648
        %v767 = vmul.f32 %v766, 1.442695
        %v768 = vpow.pop %v767
        %v769 = vadd.f32 %v768, 1.0
        %v770 = vrcp.pop %v769
        %v771 = vmul.f32 %v769, %v770
        %v772 = vsub.f32 1.0, %v771
        %v773 = vmul.f32 %v770, %v772
        %v774 = vadd.f32 %v770, %v773
        %vm775 = vweird.f32 %v769
        %vm776 = vweird.f32 %v770
        %vm777 = vmor %vm775, %vm776
        %v778 = vsel %vm777, %v770, %v774
        %v779 = vand.u32 2147483647, %v769
        %vm780 = vcmp.eq.f32.partialorder %v779, 8.507059e+37
        %v781 = vand.u32 %v769, 2147483648
        %v782 = vor.u32 1.1754944e-38, %v781
        %v783 = vsel %vm780, %v782, %v778
        %v784 = vmul.f32 1.0, %v783
        %v785 = vtanh.pop %v765
        %v786 = vmul.f32 %v784, %v667
        %788 = vrot.lane.b32.xlu0 %v785, 64
        %v789 = vpop.permute.xlu0 %788
        %v791 = vmul.f32 %v784, %v789
        %793 = vrot.lane.b32.xlu0 %v791, 32
        %v794 = vpop.permute.xlu0 %793
        %v796 = vadd.f32 %v786, %v794
        %v797 = vtanh.pop %v796
        %799 = vrot.lane.b32.xlu0 %v797, 64
        %v800 = vpop.permute.xlu0 %799
        %v802 = vmul.f32 %v784, %v800
        %v803 = vpack.c.bf16 %v802, %v802
        %804 = vmatpush.bf16.msra.mxu0 0
        %805 = vmatpush.bf16.msra.mxu0 0
        %806 = vmatpush.bf16.msra.mxu0 0
        %807 = vmatpush.bf16.msra.mxu0 0
        %808 = vmatpush.bf16.msra.mxu0 0
        %809 = vmatpush.bf16.msra.mxu0 0
        %810 = vmatpush.bf16.msra.mxu0 %v513
        %811 = vmatpush.bf16.msra.mxu0 %v512
        %812 = vmatmul.bf16.gmra.mxu0 %v750
        %v813 = vpop.f32.mrf.mxu0
        %v814 = vadd.f32 0.0, %v813
        %v815 = vpop.f32.mrf.mxu0
        %816 = vdwg.mxu0
        %v817 = vadd.f32 %v482, %v814
        %v818 = vxor.u32 %v817, 2147483648
        %v819 = vmul.f32 %v818, 1.442695
        %v820 = vpow.pop %v819
        %v821 = vadd.f32 %v820, 1.0
        %v822 = vrcp.pop %v821
        %v823 = vmul.f32 %v821, %v822
        %v824 = vsub.f32 1.0, %v823
        %v825 = vmul.f32 %v822, %v824
        %v826 = vadd.f32 %v822, %v825
        %vm827 = vweird.f32 %v821
        %vm828 = vweird.f32 %v822
        %vm829 = vmor %vm827, %vm828
        %v830 = vsel %vm829, %v822, %v826
        %v831 = vand.u32 2147483647, %v821
        %vm832 = vcmp.eq.f32.partialorder %v831, 8.507059e+37
        %v833 = vand.u32 %v821, 2147483648
        %v834 = vor.u32 1.1754944e-38, %v833
        %v835 = vsel %vm832, %v834, %v830
        %v836 = vmul.f32 1.0, %v835
        %v837 = vtanh.pop %v817
        %v838 = vmul.f32 %v836, %v719
        %840 = vrot.lane.b32.xlu0 %v837, 64
        %v841 = vpop.permute.xlu0 %840
        %v843 = vmul.f32 %v836, %v841
        %845 = vrot.lane.b32.xlu0 %v843, 32
        %v846 = vpop.permute.xlu0 %845
        %v848 = vadd.f32 %v838, %v846
        %v849 = vtanh.pop %v848
        %851 = vrot.lane.b32.xlu0 %v849, 64
        %v852 = vpop.permute.xlu0 %851
        %v854 = vmul.f32 %v836, %v852
        %v855 = vpack.c.bf16 %v854, %v854
        %857 = vrot.lane.b32.xlu0 %v803, 32
        %v858 = vpop.permute.xlu0 %857
        %v860 = vsel %vm516, %v858, 0
        %862 = vmatpush.bf16.msra.mxu0 0
        %863 = vmatpush.bf16.msra.mxu0 0
        %864 = vmatpush.bf16.msra.mxu0 0
        %865 = vmatpush.bf16.msra.mxu0 0
        %866 = vmatpush.bf16.msra.mxu0 0
        %867 = vmatpush.bf16.msra.mxu0 0
        %868 = vmatpush.bf16.msra.mxu0 %v589
        %869 = vmatpush.bf16.msra.mxu0 %v588
        %870 = vmatmul.bf16.gmra.mxu0 %v860
        %v871 = vpop.f32.mrf.mxu0
        %v872 = vadd.f32 0.0, %v871
        %v873 = vpop.f32.mrf.mxu0
        %874 = vdwg.mxu0
        %876 = vrot.lane.b32.xlu0 %v855, 32
        %v877 = vpop.permute.xlu0 %876
        %v879 = vsel %vm516, %v877, 0
        %881 = vmatpush.bf16.msra.mxu0 0
        %882 = vmatpush.bf16.msra.mxu0 0
        %883 = vmatpush.bf16.msra.mxu0 0
        %884 = vmatpush.bf16.msra.mxu0 0
        %885 = vmatpush.bf16.msra.mxu0 0
        %886 = vmatpush.bf16.msra.mxu0 0
        %887 = vmatpush.bf16.msra.mxu0 %v617
        %888 = vmatpush.bf16.msra.mxu0 %v616
        %889 = vmatmul.bf16.gmra.mxu0 %v879
        %v890 = vpop.f32.mrf.mxu0
        %v891 = vadd.f32 %v872, %v890
        %v892 = vpop.f32.mrf.mxu0
        %893 = vdwg.mxu0
        %v894 = vadd.f32 %v891, %v498
        %v895 = vxor.u32 %v894, 2147483648
        %v896 = vmul.f32 %v895, 1.442695
        %v897 = vpow.pop %v896
        %v898 = vadd.f32 %v897, 1.0
        %v899 = vrcp.pop %v898
        %v900 = vmul.f32 %v898, %v899
        %v901 = vsub.f32 1.0, %v900
        %v902 = vmul.f32 %v899, %v901
        %v903 = vadd.f32 %v899, %v902
        %vm904 = vweird.f32 %v898
        %vm905 = vweird.f32 %v899
        %vm906 = vmor %vm904, %vm905
        %v907 = vsel %vm906, %v899, %v903
        %v908 = vand.u32 2147483647, %v898
        %vm909 = vcmp.eq.f32.partialorder %v908, 8.507059e+37
        %v910 = vand.u32 %v898, 2147483648
        %v911 = vor.u32 1.1754944e-38, %v910
        %v912 = vsel %vm909, %v911, %v907
        %v913 = vmul.f32 1.0, %v912
        %v914 = vtanh.pop %v894
        %v915 = vmul.f32 %v913, %v796
        %917 = vrot.lane.b32.xlu0 %v914, 64
        %v918 = vpop.permute.xlu0 %917
        %v920 = vmul.f32 %v913, %v918
        %922 = vrot.lane.b32.xlu0 %v920, 32
        %v923 = vpop.permute.xlu0 %922
        %v925 = vadd.f32 %v915, %v923
        %v926 = vtanh.pop %v925
        %928 = vrot.lane.b32.xlu0 %v926, 64
        %v929 = vpop.permute.xlu0 %928
        %v931 = vmul.f32 %v913, %v929
        %v932 = vpack.c.bf16 %v931, %v931
        %933 = vmatpush.bf16.msra.mxu0 0
        %934 = vmatpush.bf16.msra.mxu0 0
        %935 = vmatpush.bf16.msra.mxu0 0
        %936 = vmatpush.bf16.msra.mxu0 0
        %937 = vmatpush.bf16.msra.mxu0 0
        %938 = vmatpush.bf16.msra.mxu0 0
        %939 = vmatpush.bf16.msra.mxu0 %v513
        %940 = vmatpush.bf16.msra.mxu0 %v512
        %941 = vmatmul.bf16.gmra.mxu0 %v879
        %v942 = vpop.f32.mrf.mxu0
        %v943 = vadd.f32 0.0, %v942
        %v944 = vpop.f32.mrf.mxu0
        %945 = vdwg.mxu0
        %v946 = vadd.f32 %v484, %v943
        %v947 = vxor.u32 %v946, 2147483648
        %v948 = vmul.f32 %v947, 1.442695
        %v949 = vpow.pop %v948
        %v950 = vadd.f32 %v949, 1.0
        %v951 = vrcp.pop %v950
        %v952 = vmul.f32 %v950, %v951
        %v953 = vsub.f32 1.0, %v952
        %v954 = vmul.f32 %v951, %v953
        %v955 = vadd.f32 %v951, %v954
        %vm956 = vweird.f32 %v950
        %vm957 = vweird.f32 %v951
        %vm958 = vmor %vm956, %vm957
        %v959 = vsel %vm958, %v951, %v955
        %v960 = vand.u32 2147483647, %v950
        %vm961 = vcmp.eq.f32.partialorder %v960, 8.507059e+37
        %v962 = vand.u32 %v950, 2147483648
        %v963 = vor.u32 1.1754944e-38, %v962
        %v964 = vsel %vm961, %v963, %v959
        %v965 = vmul.f32 1.0, %v964
        %v966 = vtanh.pop %v946
        %v967 = vmul.f32 %v965, %v848
        %969 = vrot.lane.b32.xlu0 %v966, 64
        %v970 = vpop.permute.xlu0 %969
        %v972 = vmul.f32 %v965, %v970
        %974 = vrot.lane.b32.xlu0 %v972, 32
        %v975 = vpop.permute.xlu0 %974
        %v977 = vadd.f32 %v967, %v975
        %v978 = vtanh.pop %v977
        %980 = vrot.lane.b32.xlu0 %v978, 64
        %v981 = vpop.permute.xlu0 %980
        %v983 = vmul.f32 %v965, %v981
        %v984 = vpack.c.bf16 %v983, %v983
        %986 = vrot.lane.b32.xlu0 %v932, 32
        %v987 = vpop.permute.xlu0 %986
        %v989 = vsel %vm516, %v987, 0
        %991 = vmatpush.bf16.msra.mxu0 0
        %992 = vmatpush.bf16.msra.mxu0 0
        %993 = vmatpush.bf16.msra.mxu0 0
        %994 = vmatpush.bf16.msra.mxu0 0
        %995 = vmatpush.bf16.msra.mxu0 0
        %996 = vmatpush.bf16.msra.mxu0 0
        %997 = vmatpush.bf16.msra.mxu0 %v589
        %998 = vmatpush.bf16.msra.mxu0 %v588
        %999 = vmatmul.bf16.gmra.mxu0 %v989
        %v1000 = vpop.f32.mrf.mxu0
        %v1001 = vadd.f32 0.0, %v1000
        %v1002 = vpop.f32.mrf.mxu0
        %1003 = vdwg.mxu0
        %1005 = vrot.lane.b32.xlu0 %v984, 32
        %v1006 = vpop.permute.xlu0 %1005
        %v1008 = vsel %vm516, %v1006, 0
        %1010 = vmatpush.bf16.msra.mxu0 0
        %1011 = vmatpush.bf16.msra.mxu0 0
        %1012 = vmatpush.bf16.msra.mxu0 0
        %1013 = vmatpush.bf16.msra.mxu0 0
        %1014 = vmatpush.bf16.msra.mxu0 0
        %1015 = vmatpush.bf16.msra.mxu0 0
        %1016 = vmatpush.bf16.msra.mxu0 %v617
        %1017 = vmatpush.bf16.msra.mxu0 %v616
        %1018 = vmatmul.bf16.gmra.mxu0 %v1008
        %v1019 = vpop.f32.mrf.mxu0
        %v1020 = vadd.f32 %v1001, %v1019
        %v1021 = vpop.f32.mrf.mxu0
        %1022 = vdwg.mxu0
        %v1023 = vadd.f32 %v1020, %v498
        %v1024 = vxor.u32 %v1023, 2147483648
        %v1025 = vmul.f32 %v1024, 1.442695
        %v1026 = vpow.pop %v1025
        %v1027 = vadd.f32 %v1026, 1.0
        %v1028 = vrcp.pop %v1027
        %v1029 = vmul.f32 %v1027, %v1028
        %v1030 = vsub.f32 1.0, %v1029
        %v1031 = vmul.f32 %v1028, %v1030
        %v1032 = vadd.f32 %v1028, %v1031
        %vm1033 = vweird.f32 %v1027
        %vm1034 = vweird.f32 %v1028
        %vm1035 = vmor %vm1033, %vm1034
        %v1036 = vsel %vm1035, %v1028, %v1032
        %v1037 = vand.u32 2147483647, %v1027
        %vm1038 = vcmp.eq.f32.partialorder %v1037, 8.507059e+37
        %v1039 = vand.u32 %v1027, 2147483648
        %v1040 = vor.u32 1.1754944e-38, %v1039
        %v1041 = vsel %vm1038, %v1040, %v1036
        %v1042 = vmul.f32 1.0, %v1041
        %v1043 = vtanh.pop %v1023
        %v1044 = vmul.f32 %v1042, %v925
        %1046 = vrot.lane.b32.xlu0 %v1043, 64
        %v1047 = vpop.permute.xlu0 %1046
        %v1049 = vmul.f32 %v1042, %v1047
        %1051 = vrot.lane.b32.xlu0 %v1049, 32
        %v1052 = vpop.permute.xlu0 %1051
        %v1054 = vadd.f32 %v1044, %v1052
        %v1055 = vtanh.pop %v1054
        %1057 = vrot.lane.b32.xlu0 %v1055, 64
        %v1058 = vpop.permute.xlu0 %1057
        %v1060 = vmul.f32 %v1042, %v1058
        %v1061 = vpack.c.bf16 %v1060, %v1060
        %1062 = vmatpush.bf16.msra.mxu0 0
        %1063 = vmatpush.bf16.msra.mxu0 0
        %1064 = vmatpush.bf16.msra.mxu0 0
        %1065 = vmatpush.bf16.msra.mxu0 0
        %1066 = vmatpush.bf16.msra.mxu0 0
        %1067 = vmatpush.bf16.msra.mxu0 0
        %1068 = vmatpush.bf16.msra.mxu0 %v513
        %1069 = vmatpush.bf16.msra.mxu0 %v512
        %1070 = vmatmul.bf16.gmra.mxu0 %v1008
        %v1071 = vpop.f32.mrf.mxu0
        %v1072 = vadd.f32 0.0, %v1071
        %v1073 = vpop.f32.mrf.mxu0
        %1074 = vdwg.mxu0
        %v1075 = vadd.f32 %v487, %v1072
        %v1076 = vxor.u32 %v1075, 2147483648
        %v1077 = vmul.f32 %v1076, 1.442695
        %v1078 = vpow.pop %v1077
        %v1079 = vadd.f32 %v1078, 1.0
        %v1080 = vrcp.pop %v1079
        %v1081 = vmul.f32 %v1079, %v1080
        %v1082 = vsub.f32 1.0, %v1081
        %v1083 = vmul.f32 %v1080, %v1082
        %v1084 = vadd.f32 %v1080, %v1083
        %vm1085 = vweird.f32 %v1079
        %vm1086 = vweird.f32 %v1080
        %vm1087 = vmor %vm1085, %vm1086
        %v1088 = vsel %vm1087, %v1080, %v1084
        %v1089 = vand.u32 2147483647, %v1079
        %vm1090 = vcmp.eq.f32.partialorder %v1089, 8.507059e+37
        %v1091 = vand.u32 %v1079, 2147483648
        %v1092 = vor.u32 1.1754944e-38, %v1091
        %v1093 = vsel %vm1090, %v1092, %v1088
        %v1094 = vmul.f32 1.0, %v1093
        %v1095 = vtanh.pop %v1075
        %v1096 = vmul.f32 %v1094, %v977
        %1098 = vrot.lane.b32.xlu0 %v1095, 64
        %v1099 = vpop.permute.xlu0 %1098
        %v1101 = vmul.f32 %v1094, %v1099
        %1103 = vrot.lane.b32.xlu0 %v1101, 32
        %v1104 = vpop.permute.xlu0 %1103
        %v1106 = vadd.f32 %v1096, %v1104
        %v1107 = vtanh.pop %v1106
        %1109 = vrot.lane.b32.xlu0 %v1107, 64
        %v1110 = vpop.permute.xlu0 %1109
        %v1112 = vmul.f32 %v1094, %v1110
        %v1113 = vpack.c.bf16 %v1112, %v1112
        %1115 = vrot.lane.b32.xlu0 %v1061, 32
        %v1116 = vpop.permute.xlu0 %1115
        %v1118 = vsel %vm516, %v1116, 0
        %1120 = vmatpush.bf16.msra.mxu0 0
        %1121 = vmatpush.bf16.msra.mxu0 0
        %1122 = vmatpush.bf16.msra.mxu0 0
        %1123 = vmatpush.bf16.msra.mxu0 0
        %1124 = vmatpush.bf16.msra.mxu0 0
        %1125 = vmatpush.bf16.msra.mxu0 0
        %1126 = vmatpush.bf16.msra.mxu0 %v589
        %1127 = vmatpush.bf16.msra.mxu0 %v588
        %1128 = vmatmul.bf16.gmra.mxu0 %v1118
        %v1129 = vpop.f32.mrf.mxu0
        %v1130 = vadd.f32 0.0, %v1129
        %v1131 = vpop.f32.mrf.mxu0
        %1132 = vdwg.mxu0
        %1134 = vrot.lane.b32.xlu0 %v1113, 32
        %v1135 = vpop.permute.xlu0 %1134
        %v1137 = vsel %vm516, %v1135, 0
        %1139 = vmatpush.bf16.msra.mxu0 0
        %1140 = vmatpush.bf16.msra.mxu0 0
        %1141 = vmatpush.bf16.msra.mxu0 0
        %1142 = vmatpush.bf16.msra.mxu0 0
        %1143 = vmatpush.bf16.msra.mxu0 0
        %1144 = vmatpush.bf16.msra.mxu0 0
        %1145 = vmatpush.bf16.msra.mxu0 %v617
        %1146 = vmatpush.bf16.msra.mxu0 %v616
        %1147 = vmatmul.bf16.gmra.mxu0 %v1137
        %v1148 = vpop.f32.mrf.mxu0
        %v1149 = vadd.f32 %v1130, %v1148
        %v1150 = vpop.f32.mrf.mxu0
        %1151 = vdwg.mxu0
        %v1152 = vadd.f32 %v1149, %v498
        %v1153 = vxor.u32 %v1152, 2147483648
        %v1154 = vmul.f32 %v1153, 1.442695
        %v1155 = vpow.pop %v1154
        %v1156 = vadd.f32 %v1155, 1.0
        %v1157 = vrcp.pop %v1156
        %v1158 = vmul.f32 %v1156, %v1157
        %v1159 = vsub.f32 1.0, %v1158
        %v1160 = vmul.f32 %v1157, %v1159
        %v1161 = vadd.f32 %v1157, %v1160
        %vm1162 = vweird.f32 %v1156
        %vm1163 = vweird.f32 %v1157
        %vm1164 = vmor %vm1162, %vm1163
        %v1165 = vsel %vm1164, %v1157, %v1161
        %v1166 = vand.u32 2147483647, %v1156
        %vm1167 = vcmp.eq.f32.partialorder %v1166, 8.507059e+37
        %v1168 = vand.u32 %v1156, 2147483648
        %v1169 = vor.u32 1.1754944e-38, %v1168
        %v1170 = vsel %vm1167, %v1169, %v1165
        %v1171 = vmul.f32 1.0, %v1170
        %v1172 = vtanh.pop %v1152
        %v1173 = vmul.f32 %v1171, %v1054
        %1175 = vrot.lane.b32.xlu0 %v1172, 64
        %v1176 = vpop.permute.xlu0 %1175
        %v1178 = vmul.f32 %v1171, %v1176
        %1180 = vrot.lane.b32.xlu0 %v1178, 32
        %v1181 = vpop.permute.xlu0 %1180
        %v1183 = vadd.f32 %v1173, %v1181
        %v1184 = vtanh.pop %v1183
        %1186 = vrot.lane.b32.xlu0 %v1184, 64
        %v1187 = vpop.permute.xlu0 %1186
        %v1189 = vmul.f32 %v1171, %v1187
        %v1190 = vpack.c.bf16 %v1189, %v1189
        %1191 = vmatpush.bf16.msra.mxu0 0
        %1192 = vmatpush.bf16.msra.mxu0 0
        %1193 = vmatpush.bf16.msra.mxu0 0
        %1194 = vmatpush.bf16.msra.mxu0 0
        %1195 = vmatpush.bf16.msra.mxu0 0
        %1196 = vmatpush.bf16.msra.mxu0 0
        %1197 = vmatpush.bf16.msra.mxu0 %v513
        %1198 = vmatpush.bf16.msra.mxu0 %v512
        %1199 = vmatmul.bf16.gmra.mxu0 %v1137
        %v1200 = vpop.f32.mrf.mxu0
        %v1201 = vadd.f32 0.0, %v1200
        %v1202 = vpop.f32.mrf.mxu0
        %1203 = vdwg.mxu0
        %v1204 = vadd.f32 %v489, %v1201
        %v1205 = vxor.u32 %v1204, 2147483648
        %v1206 = vmul.f32 %v1205, 1.442695
        %v1207 = vpow.pop %v1206
        %v1208 = vadd.f32 %v1207, 1.0
        %v1209 = vrcp.pop %v1208
        %v1210 = vmul.f32 %v1208, %v1209
        %v1211 = vsub.f32 1.0, %v1210
        %v1212 = vmul.f32 %v1209, %v1211
        %v1213 = vadd.f32 %v1209, %v1212
        %vm1214 = vweird.f32 %v1208
        %vm1215 = vweird.f32 %v1209
        %vm1216 = vmor %vm1214, %vm1215
        %v1217 = vsel %vm1216, %v1209, %v1213
        %v1218 = vand.u32 2147483647, %v1208
        %vm1219 = vcmp.eq.f32.partialorder %v1218, 8.507059e+37
        %v1220 = vand.u32 %v1208, 2147483648
        %v1221 = vor.u32 1.1754944e-38, %v1220
        %v1222 = vsel %vm1219, %v1221, %v1217
        %v1223 = vmul.f32 1.0, %v1222
        %v1224 = vtanh.pop %v1204
        %v1225 = vmul.f32 %v1223, %v1106
        %1227 = vrot.lane.b32.xlu0 %v1224, 64
        %v1228 = vpop.permute.xlu0 %1227
        %v1230 = vmul.f32 %v1223, %v1228
        %1232 = vrot.lane.b32.xlu0 %v1230, 32
        %v1233 = vpop.permute.xlu0 %1232
        %v1235 = vadd.f32 %v1225, %v1233
        %v1236 = vtanh.pop %v1235
        %1238 = vrot.lane.b32.xlu0 %v1236, 64
        %v1239 = vpop.permute.xlu0 %1238
        %v1241 = vmul.f32 %v1223, %v1239
        %v1242 = vpack.c.bf16 %v1241, %v1241
        %1244 = vrot.lane.b32.xlu0 %v1190, 32
        %v1245 = vpop.permute.xlu0 %1244
        %v1247 = vsel %vm516, %v1245, 0
        %1249 = vmatpush.bf16.msra.mxu0 0
        %1250 = vmatpush.bf16.msra.mxu0 0
        %1251 = vmatpush.bf16.msra.mxu0 0
        %1252 = vmatpush.bf16.msra.mxu0 0
        %1253 = vmatpush.bf16.msra.mxu0 0
        %1254 = vmatpush.bf16.msra.mxu0 0
        %1255 = vmatpush.bf16.msra.mxu0 %v589
        %1256 = vmatpush.bf16.msra.mxu0 %v588
        %1257 = vmatmul.bf16.gmra.mxu0 %v1247
        %v1258 = vpop.f32.mrf.mxu0
        %v1259 = vadd.f32 0.0, %v1258
        %v1260 = vpop.f32.mrf.mxu0
        %1261 = vdwg.mxu0
        %1263 = vrot.lane.b32.xlu0 %v1242, 32
        %v1264 = vpop.permute.xlu0 %1263
        %v1266 = vsel %vm516, %v1264, 0
        %1268 = vmatpush.bf16.msra.mxu0 0
        %1269 = vmatpush.bf16.msra.mxu0 0
        %1270 = vmatpush.bf16.msra.mxu0 0
        %1271 = vmatpush.bf16.msra.mxu0 0
        %1272 = vmatpush.bf16.msra.mxu0 0
        %1273 = vmatpush.bf16.msra.mxu0 0
        %1274 = vmatpush.bf16.msra.mxu0 %v617
        %1275 = vmatpush.bf16.msra.mxu0 %v616
        %1276 = vmatmul.bf16.gmra.mxu0 %v1266
        %v1277 = vpop.f32.mrf.mxu0
        %v1278 = vadd.f32 %v1259, %v1277
        %v1279 = vpop.f32.mrf.mxu0
        %1280 = vdwg.mxu0
        %v1281 = vadd.f32 %v1278, %v498
        %v1282 = vxor.u32 %v1281, 2147483648
        %v1283 = vmul.f32 %v1282, 1.442695
        %v1284 = vpow.pop %v1283
        %v1285 = vadd.f32 %v1284, 1.0
        %v1286 = vrcp.pop %v1285
        %v1287 = vmul.f32 %v1285, %v1286
        %v1288 = vsub.f32 1.0, %v1287
        %v1289 = vmul.f32 %v1286, %v1288
        %v1290 = vadd.f32 %v1286, %v1289
        %vm1291 = vweird.f32 %v1285
        %vm1292 = vweird.f32 %v1286
        %vm1293 = vmor %vm1291, %vm1292
        %v1294 = vsel %vm1293, %v1286, %v1290
        %v1295 = vand.u32 2147483647, %v1285
        %vm1296 = vcmp.eq.f32.partialorder %v1295, 8.507059e+37
        %v1297 = vand.u32 %v1285, 2147483648
        %v1298 = vor.u32 1.1754944e-38, %v1297
        %v1299 = vsel %vm1296, %v1298, %v1294
        %v1300 = vmul.f32 1.0, %v1299
        %v1301 = vtanh.pop %v1281
        %v1302 = vmul.f32 %v1300, %v1183
        %1304 = vrot.lane.b32.xlu0 %v1301, 64
        %v1305 = vpop.permute.xlu0 %1304
        %v1307 = vmul.f32 %v1300, %v1305
        %1309 = vrot.lane.b32.xlu0 %v1307, 32
        %v1310 = vpop.permute.xlu0 %1309
        %v1312 = vadd.f32 %v1302, %v1310
        %v1313 = vtanh.pop %v1312
        %1315 = vrot.lane.b32.xlu0 %v1313, 64
        %v1316 = vpop.permute.xlu0 %1315
        %v1318 = vmul.f32 %v1300, %v1316
        %v1319 = vpack.c.bf16 %v1318, %v1318
        %1320 = vmatpush.bf16.msra.mxu0 0
        %1321 = vmatpush.bf16.msra.mxu0 0
        %1322 = vmatpush.bf16.msra.mxu0 0
        %1323 = vmatpush.bf16.msra.mxu0 0
        %1324 = vmatpush.bf16.msra.mxu0 0
        %1325 = vmatpush.bf16.msra.mxu0 0
        %1326 = vmatpush.bf16.msra.mxu0 %v513
        %1327 = vmatpush.bf16.msra.mxu0 %v512
        %1328 = vmatmul.bf16.gmra.mxu0 %v1266
        %v1329 = vpop.f32.mrf.mxu0
        %v1330 = vadd.f32 0.0, %v1329
        %v1331 = vpop.f32.mrf.mxu0
        %1332 = vdwg.mxu0
        %v1333 = vadd.f32 %v492, %v1330
        %v1334 = vxor.u32 %v1333, 2147483648
        %v1335 = vmul.f32 %v1334, 1.442695
        %v1336 = vpow.pop %v1335
        %v1337 = vadd.f32 %v1336, 1.0
        %v1338 = vrcp.pop %v1337
        %v1339 = vmul.f32 %v1337, %v1338
        %v1340 = vsub.f32 1.0, %v1339
        %v1341 = vmul.f32 %v1338, %v1340
        %v1342 = vadd.f32 %v1338, %v1341
        %vm1343 = vweird.f32 %v1337
        %vm1344 = vweird.f32 %v1338
        %vm1345 = vmor %vm1343, %vm1344
        %v1346 = vsel %vm1345, %v1338, %v1342
        %v1347 = vand.u32 2147483647, %v1337
        %vm1348 = vcmp.eq.f32.partialorder %v1347, 8.507059e+37
        %v1349 = vand.u32 %v1337, 2147483648
        %v1350 = vor.u32 1.1754944e-38, %v1349
        %v1351 = vsel %vm1348, %v1350, %v1346
        %v1352 = vmul.f32 1.0, %v1351
        %v1353 = vtanh.pop %v1333
        %v1354 = vmul.f32 %v1352, %v1235
        %1356 = vrot.lane.b32.xlu0 %v1353, 64
        %v1357 = vpop.permute.xlu0 %1356
        %v1359 = vmul.f32 %v1352, %v1357
        %1361 = vrot.lane.b32.xlu0 %v1359, 32
        %v1362 = vpop.permute.xlu0 %1361
        %v1364 = vadd.f32 %v1354, %v1362
        %v1365 = vtanh.pop %v1364
        %1367 = vrot.lane.b32.xlu0 %v1365, 64
        %v1368 = vpop.permute.xlu0 %1367
        %v1370 = vmul.f32 %v1352, %v1368
        %v1371 = vpack.c.bf16 %v1370, %v1370
        %1373 = vrot.lane.b32.xlu0 %v1319, 32
        %v1374 = vpop.permute.xlu0 %1373
        %v1376 = vsel %vm516, %v1374, 0
        %1378 = vmatpush.bf16.msra.mxu0 0
        %1379 = vmatpush.bf16.msra.mxu0 0
        %1380 = vmatpush.bf16.msra.mxu0 0
        %1381 = vmatpush.bf16.msra.mxu0 0
        %1382 = vmatpush.bf16.msra.mxu0 0
        %1383 = vmatpush.bf16.msra.mxu0 0
        %1384 = vmatpush.bf16.msra.mxu0 %v589
        %1385 = vmatpush.bf16.msra.mxu0 %v588
        %1386 = vmatmul.bf16.gmra.mxu0 %v1376
        %v1387 = vpop.f32.mrf.mxu0
        %v1388 = vadd.f32 0.0, %v1387
        %v1389 = vpop.f32.mrf.mxu0
        %1390 = vdwg.mxu0
        %1392 = vrot.lane.b32.xlu0 %v1371, 32
        %v1393 = vpop.permute.xlu0 %1392
        %v1395 = vsel %vm516, %v1393, 0
        %1397 = vmatpush.bf16.msra.mxu0 0
        %1398 = vmatpush.bf16.msra.mxu0 0
        %1399 = vmatpush.bf16.msra.mxu0 0
        %1400 = vmatpush.bf16.msra.mxu0 0
        %1401 = vmatpush.bf16.msra.mxu0 0
        %1402 = vmatpush.bf16.msra.mxu0 0
        %1403 = vmatpush.bf16.msra.mxu0 %v617
        %1404 = vmatpush.bf16.msra.mxu0 %v616
        %1405 = vmatmul.bf16.gmra.mxu0 %v1395
        %v1406 = vpop.f32.mrf.mxu0
        %v1407 = vadd.f32 %v1388, %v1406
        %v1408 = vpop.f32.mrf.mxu0
        %1409 = vdwg.mxu0
        %v1410 = vadd.f32 %v1407, %v498
        %v1411 = vxor.u32 %v1410, 2147483648
        %v1412 = vmul.f32 %v1411, 1.442695
        %v1413 = vpow.pop %v1412
        %v1414 = vadd.f32 %v1413, 1.0
        %v1415 = vrcp.pop %v1414
        %v1416 = vmul.f32 %v1414, %v1415
        %v1417 = vsub.f32 1.0, %v1416
        %v1418 = vmul.f32 %v1415, %v1417
        %v1419 = vadd.f32 %v1415, %v1418
        %vm1420 = vweird.f32 %v1414
        %vm1421 = vweird.f32 %v1415
        %vm1422 = vmor %vm1420, %vm1421
        %v1423 = vsel %vm1422, %v1415, %v1419
        %v1424 = vand.u32 2147483647, %v1414
        %vm1425 = vcmp.eq.f32.partialorder %v1424, 8.507059e+37
        %v1426 = vand.u32 %v1414, 2147483648
        %v1427 = vor.u32 1.1754944e-38, %v1426
        %v1428 = vsel %vm1425, %v1427, %v1423
        %v1429 = vmul.f32 1.0, %v1428
        %v1430 = vtanh.pop %v1410
        %v1431 = vmul.f32 %v1429, %v1312
        %1433 = vrot.lane.b32.xlu0 %v1430, 64
        %v1434 = vpop.permute.xlu0 %1433
        %v1436 = vmul.f32 %v1429, %v1434
        %1438 = vrot.lane.b32.xlu0 %v1436, 32
        %v1439 = vpop.permute.xlu0 %1438
        %v1441 = vadd.f32 %v1431, %v1439
        %v1442 = vtanh.pop %v1441
        %1444 = vrot.lane.b32.xlu0 %v1442, 64
        %v1445 = vpop.permute.xlu0 %1444
        %v1447 = vmul.f32 %v1429, %v1445
        %v1448 = vpack.c.bf16 %v1447, %v1447
        %1449 = vmatpush.bf16.msra.mxu0 0
        %1450 = vmatpush.bf16.msra.mxu0 0
        %1451 = vmatpush.bf16.msra.mxu0 0
        %1452 = vmatpush.bf16.msra.mxu0 0
        %1453 = vmatpush.bf16.msra.mxu0 0
        %1454 = vmatpush.bf16.msra.mxu0 0
        %1455 = vmatpush.bf16.msra.mxu0 %v513
        %1456 = vmatpush.bf16.msra.mxu0 %v512
        %1457 = vmatmul.bf16.gmra.mxu0 %v1395
        %v1458 = vpop.f32.mrf.mxu0
        %v1459 = vadd.f32 0.0, %v1458
        %v1460 = vpop.f32.mrf.mxu0
        %1461 = vdwg.mxu0
        %v1462 = vadd.f32 %v494, %v1459
        %v1463 = vxor.u32 %v1462, 2147483648
        %v1464 = vmul.f32 %v1463, 1.442695
        %v1465 = vpow.pop %v1464
        %v1466 = vadd.f32 %v1465, 1.0
        %v1467 = vrcp.pop %v1466
        %v1468 = vmul.f32 %v1466, %v1467
        %v1469 = vsub.f32 1.0, %v1468
        %v1470 = vmul.f32 %v1467, %v1469
        %v1471 = vadd.f32 %v1467, %v1470
        %vm1472 = vweird.f32 %v1466
        %vm1473 = vweird.f32 %v1467
        %vm1474 = vmor %vm1472, %vm1473
        %v1475 = vsel %vm1474, %v1467, %v1471
        %v1476 = vand.u32 2147483647, %v1466
        %vm1477 = vcmp.eq.f32.partialorder %v1476, 8.507059e+37
        %v1478 = vand.u32 %v1466, 2147483648
        %v1479 = vor.u32 1.1754944e-38, %v1478
        %v1480 = vsel %vm1477, %v1479, %v1475
        %v1481 = vmul.f32 1.0, %v1480
        %v1482 = vtanh.pop %v1462
        %v1483 = vmul.f32 %v1481, %v1364
        %1485 = vrot.lane.b32.xlu0 %v1482, 64
        %v1486 = vpop.permute.xlu0 %1485
        %v1488 = vmul.f32 %v1481, %v1486
        %1490 = vrot.lane.b32.xlu0 %v1488, 32
        %v1491 = vpop.permute.xlu0 %1490
        %v1493 = vadd.f32 %v1483, %v1491
        %v1494 = vtanh.pop %v1493
        %1496 = vrot.lane.b32.xlu0 %v1494, 64
        %v1497 = vpop.permute.xlu0 %1496
        %v1499 = vmul.f32 %v1481, %v1497
        %v1500 = vpack.c.bf16 %v1499, %v1499
        %1502 = vrot.lane.b32.xlu0 %v1448, 32
        %v1503 = vpop.permute.xlu0 %1502
        %v1505 = vsel %vm516, %v1503, 0
        %1507 = vmatpush.bf16.msra.mxu0 0
        %1508 = vmatpush.bf16.msra.mxu0 0
        %1509 = vmatpush.bf16.msra.mxu0 0
        %1510 = vmatpush.bf16.msra.mxu0 0
        %1511 = vmatpush.bf16.msra.mxu0 0
        %1512 = vmatpush.bf16.msra.mxu0 0
        %1513 = vmatpush.bf16.msra.mxu0 %v589
        %1514 = vmatpush.bf16.msra.mxu0 %v588
        %1515 = vmatmul.bf16.gmra.mxu0 %v1505
        %v1516 = vpop.f32.mrf.mxu0
        %v1517 = vadd.f32 0.0, %v1516
        %v1518 = vpop.f32.mrf.mxu0
        %1519 = vdwg.mxu0
        %1521 = vrot.lane.b32.xlu0 %v1500, 32
        %v1522 = vpop.permute.xlu0 %1521
        %v1524 = vsel %vm516, %v1522, 0
        %1526 = vmatpush.bf16.msra.mxu0 0
        %1527 = vmatpush.bf16.msra.mxu0 0
        %1528 = vmatpush.bf16.msra.mxu0 0
        %1529 = vmatpush.bf16.msra.mxu0 0
        %1530 = vmatpush.bf16.msra.mxu0 0
        %1531 = vmatpush.bf16.msra.mxu0 0
        %1532 = vmatpush.bf16.msra.mxu0 %v617
        %1533 = vmatpush.bf16.msra.mxu0 %v616
        %1534 = vmatmul.bf16.gmra.mxu0 %v1524
        %v1535 = vpop.f32.mrf.mxu0
        %v1536 = vadd.f32 %v1517, %v1535
        %v1537 = vpop.f32.mrf.mxu0
        %1538 = vdwg.mxu0
        %v1539 = vadd.f32 %v1536, %v498
        %v1540 = vxor.u32 %v1539, 2147483648
        %v1541 = vmul.f32 %v1540, 1.442695
        %v1542 = vpow.pop %v1541
        %v1543 = vadd.f32 %v1542, 1.0
        %v1544 = vrcp.pop %v1543
        %v1545 = vmul.f32 %v1543, %v1544
        %v1546 = vsub.f32 1.0, %v1545
        %v1547 = vmul.f32 %v1544, %v1546
        %v1548 = vadd.f32 %v1544, %v1547
        %vm1549 = vweird.f32 %v1543
        %vm1550 = vweird.f32 %v1544
        %vm1551 = vmor %vm1549, %vm1550
        %v1552 = vsel %vm1551, %v1544, %v1548
        %v1553 = vand.u32 2147483647, %v1543
        %vm1554 = vcmp.eq.f32.partialorder %v1553, 8.507059e+37
        %v1555 = vand.u32 %v1543, 2147483648
        %v1556 = vor.u32 1.1754944e-38, %v1555
        %v1557 = vsel %vm1554, %v1556, %v1552
        %v1558 = vmul.f32 1.0, %v1557
        %v1559 = vtanh.pop %v1539
        %v1560 = vmul.f32 %v1558, %v1441
        %1562 = vrot.lane.b32.xlu0 %v1559, 64
        %v1563 = vpop.permute.xlu0 %1562
        %v1565 = vmul.f32 %v1558, %v1563
        %1567 = vrot.lane.b32.xlu0 %v1565, 32
        %v1568 = vpop.permute.xlu0 %1567
        %v1570 = vadd.f32 %v1560, %v1568
        %v1571 = vtanh.pop %v1570
        %1573 = vrot.lane.b32.xlu0 %v1571, 64
        %v1574 = vpop.permute.xlu0 %1573
        %v1576 = vmul.f32 %v1558, %v1574
        %v1577 = vpack.c.bf16 %v1576, %v1576
        %v1578 = vld [vmem:[%s7] sm:$0xf]
        %v1579 = vld [vmem:[%s7 + $0x4] sm:$0xf]
        %v1580 = vld [vmem:[%s7 + $0x8] sm:$0xf]
        %v1581 = vld [vmem:[%s7 + $0xc] sm:$0xf]
        %v1582 = vld [vmem:[%s8] sm:$0x1]
        %v1584 = vperm.slane %v1582, 0
        %1587 = vrot.lane.b32.xlu0 %v1577, 32
        %v1588 = vpop.permute.xlu0 %1587
        %v1593 = vunpack.c.l.b16 %v1578
        %v1594 = vunpack.c.l.b16 %v1579
        %v1595 = vunpack.c.l.b16 %v1580
        %v1596 = vunpack.c.l.b16 %v1581
        %v1597 = vpack.c.b16 %v1594, %v1593
        %v1598 = vpack.c.b16 %v1596, %v1595
        %v1602 = vsel %vm516, %v1588, 0
        %1604 = vmatpush.bf16.msra.mxu0 0
        %1605 = vmatpush.bf16.msra.mxu0 0
        %1606 = vmatpush.bf16.msra.mxu0 0
        %1607 = vmatpush.bf16.msra.mxu0 0
        %1608 = vmatpush.bf16.msra.mxu0 0
        %1609 = vmatpush.bf16.msra.mxu0 0
        %1610 = vmatpush.bf16.msra.mxu0 %v1598
        %1611 = vmatpush.bf16.msra.mxu0 %v1597
        %1612 = vmatmul.bf16.gmra.mxu0 %v1602
        %v1613 = vpop.f32.mrf.mxu0
        %v1614 = vadd.f32 %v1584, %v1613
        %v1615 = vpop.f32.mrf.mxu0
        %1616 = vdwg.mxu0
        %vm1617 = vcmask 80896
        %1618 = vst.msk [vmem:[%s401] sm:$0xff] %vm1617, %v1614
        %s1619 = sand.u32 %s230, 1
        %s1620 = scalar_lea.sflag [#allocation4], %s1619
        %s1621 = sand.u32 %s230, 1
        %s1622 = smul.addr %s1621, 8
        %s1623 = scalar_lea.vmem [#allocation10], %s1622
        // Predicated region
        $region73: #{tpu_custom_call.1} parent=55 // pred_check
          %p1624 = pneg %p240
        $region74: #{tpu_custom_call.1} parent=55 // pred_check_branch
          %1626 = sbr.rel (%p1624) target = $region76
        $region75: #{tpu_custom_call.1} parent=55 // pred_region
          %1628 = vsyncadd %s1620, 0
          %s1629 = smul.addr %s28, 8
          %s1630 = scalar_lea.hbm %s9, %s1629
          %s1632 = sshll.u32 %s1623, 4
          %s1633 = int_to_ptr.vmem [resolvable:$true] %s1632
          %s1634 = sshll.u32 %s1630, 4
          %s1635 = int_to_ptr.hbm [resolvable:$true] %s1634
          %1637 = dma.vmem_to_hbm [thread:$0]  %s1633, 128, %s1635, %s1620
        $region76: #{tpu_custom_call.1} parent=55 // pred_fallthru
          _
      $region56: #{tpu_custom_call.1} parent=5 // pred_fallthru
        _
      %p1638 = scmp.le.s32.totalorder 2, %s23
      // Predicated region
      $region77: #{tpu_custom_call.1} parent=5 // pred_check
        %p1639 = pneg %p1638
      $region78: #{tpu_custom_call.1} parent=5 // pred_check_branch
        %1641 = sbr.rel (%p1639) target = $region80
      $region79: #{tpu_custom_call.1} parent=5 // pred_region
        %s1642 = ssub.s32 %s23, 2
        // Predicated region
        $region81: #{tpu_custom_call.1} parent=79 // pred_check
          %p1643 = pneg %p246
        $region82: #{tpu_custom_call.1} parent=79 // pred_check_branch
          %1645 = sbr.rel (%p1643) target = $region84
        $region83: #{tpu_custom_call.1} parent=79 // pred_region
          %s1646 = sand.u32 %s231, 1
          %s1647 = scalar_lea.sflag [#allocation4], %s1646
          %s1648 = sand.u32 %s231, 1
          %s1649 = smul.addr %s1648, 8
          %s1650 = scalar_lea.vmem [#allocation10], %s1649
          %1652 = dma.done %s1647, 128
        $region84: #{tpu_custom_call.1} parent=79 // pred_fallthru
          _
      $region80: #{tpu_custom_call.1} parent=5 // pred_fallthru
        _
    $region6: #{tpu_custom_call.1} parent=1 // loop_footer
      %s27 = sadd.s32 1, %s23
    $region7: #{tpu_custom_call.1} parent=1 // loop_footer_branch
      %22 = sbr.rel target = $region3
    $region8: #{tpu_custom_call.1} parent=1 // loop_exit
      _
    %1653 = vsyncpa [#allocation3], 1
    %s1654 = scalar_lea.sflag [#allocation3], 1
    %1655 = vsyncpa %s1654, 1
    %1656 = vsyncpa [#allocation6], 1
    %1657 = vsyncpa [#allocation9], 1
    %1658 = vsyncpa [#allocation4], 1
    %s1659 = scalar_lea.sflag [#allocation4], 1
    %1660 = vsyncpa %s1659, 1

</llo_original>
